<compile_context>
chip_gen: v7x
topology: tpu7x:2x2x1
jax: 0.10.0
libtpu: 0.0.40
codegen_flags: <defaults>
</compile_context>

<pallas_src>
import jax
import jax.numpy as jnp
import numpy as np
from jax.experimental import pallas as pl
from jax.experimental.pallas import tpu as pltpu

LN_EPS = 1e-5  # nn.LayerNorm default


def _ffn_kernel(x_ref, gamma_ref, beta_ref, wup_ref, wd_ref, o_ref,
                acc_ref, xn_ref):
    # x_ref:     (TM, D)     token tile (only actually read when j == 0)
    # gamma_ref: (1, D)      LayerNorm weight
    # beta_ref:  (1, D)      LayerNorm bias
    # wup_ref:   (D, 2*TH)   fused up-projection tile: [:, :TH]=value, [:, TH:]=gate
    # wd_ref:    (TH, D)     down-projection tile
    # o_ref:     (TM, D)     output tile
    # acc_ref:   (TM, D) f32 accumulator over the hidden (reduction) grid axis
    # xn_ref:    (TM, D)     cached normalized activations in MXU feed dtype
    j = pl.program_id(1)
    th = wd_ref.shape[0]

    @pl.when(j == 0)
    def _prologue():
        acc_ref[...] = jnp.zeros_like(acc_ref)
        # LayerNorm in f32 (two-pass variance), computed ONCE per row tile.
        x = x_ref[...].astype(jnp.float32)
        mean = jnp.mean(x, axis=-1, keepdims=True)
        xc = x - mean
        var = jnp.mean(xc * xc, axis=-1, keepdims=True)
        xn = xc * jax.lax.rsqrt(var + LN_EPS)
        xn = (xn * gamma_ref[...].astype(jnp.float32)
              + beta_ref[...].astype(jnp.float32))
        xn_ref[...] = xn.astype(xn_ref.dtype)

    xn = xn_ref[...]

    # Fused up projection for this hidden tile: (TM, 2*TH), value then gate.
    up = jnp.dot(xn, wup_ref[...], preferred_element_type=jnp.float32)
    val = up[:, :th]
    gate = up[:, th:]

    # swiglu: value * silu(gate)
    act = val * (gate * jax.nn.sigmoid(gate))

    # Partial down projection for this hidden tile, accumulated in f32.
    acc_ref[...] += jnp.dot(act.astype(wd_ref.dtype), wd_ref[...],
                            preferred_element_type=jnp.float32)

    @pl.when(j == pl.num_programs(1) - 1)
    def _epilogue():
        o_ref[...] = acc_ref[...].astype(o_ref.dtype)


def _estimate_vmem_bytes(tm, th, D, x_dtype, w_dtype, out_dtype):
    xb = jnp.dtype(x_dtype).itemsize
    wb = jnp.dtype(w_dtype).itemsize
    ob = jnp.dtype(out_dtype).itemsize
    act = 2 * tm * D * xb + 2 * tm * D * ob             # x / out, double-buffered
    scratch = tm * D * 4 + tm * D * wb                   # f32 acc + cached xn
    wts = 2 * (2 * D * th + th * D) * wb                 # fused-up + down, dbl-buf
    misc = 4 * 2 * D * 4                                 # gamma / beta
    return act + scratch + wts + misc


def _vmem_capacity_bytes():
    try:
        return int(pltpu.get_tpu_info().vmem_capacity_bytes)
    except Exception:
        return 64 * 1024 * 1024  # conservative (v7x-sized) fallback


def feed_forward(x, gamma, beta, w_up, w_down, *, tm=None, th=None):
    """x: (B, S, D); w_up: (D, 2H) [value half, then gate half]; w_down: (H, D)."""
    B, S, D = x.shape
    H = w_up.shape[1] // 2
    N = B * S

    vmem_cap = _vmem_capacity_bytes()
    budget = int(0.85 * vmem_cap)

    # Per-generation defaults: big chips (128 MiB VMEM: v5e/v6e) take wider
    # hidden tiles; 64 MiB chips (v7x) keep th=256 so double-buffered weight
    # slabs fit at real model dims.
    if tm is None:
        tm = 512
    if th is None:
        th = 1024 if vmem_cap >= 100 * 1024 * 1024 else 256

    tm = min(tm, N)
    th = min(th, H)
    while tm > 8 and N % tm:
        tm //= 2
    while th > 128 and H % th:
        th //= 2

    # Shrink tiles until the footprint fits the VMEM budget (th first, tm last).
    w_dtype = w_up.dtype
    while (_estimate_vmem_bytes(tm, th, D, x.dtype, w_dtype, x.dtype) > budget
           and th > 128 and H % (th // 2) == 0):
        th //= 2
    while (_estimate_vmem_bytes(tm, th, D, x.dtype, w_dtype, x.dtype) > budget
           and tm > 64 and N % (tm // 2) == 0):
        tm //= 2

    # Keep at least two row tiles so the "parallel" axis can feed both
    # TensorCores on dual-TC chips (v7x).
    if N // tm < 2 and tm >= 16 and (tm // 2) % 8 == 0 and N % (tm // 2) == 0:
        tm //= 2

    assert D % 128 == 0, "feature dim must be lane-aligned (multiple of 128)"
    assert N % tm == 0 and tm % 8 == 0, "row tile must divide N and be 8-aligned"
    assert H % th == 0, "hidden dim must be divisible by the hidden tile"
    assert th == H or th % 128 == 0, "hidden tile must be 128-aligned"

    n_rows = N // tm
    n_h = H // th

    x_flat = x.reshape(N, D)
    gamma2 = gamma.reshape(1, D)
    beta2 = beta.reshape(1, D)

    # Fuse value/gate halves per hidden tile so each grid step loads ONE
    # contiguous (D, 2*th) weight slab: [..., :th]=value, [..., th:]=gate.
    if n_h == 1:
        w_fused = w_up
    else:
        w_value = w_up[:, :H].reshape(D, n_h, th)
        w_gate = w_up[:, H:].reshape(D, n_h, th)
        w_fused = jnp.concatenate([w_value, w_gate], axis=-1).reshape(D, 2 * H)

    est = _estimate_vmem_bytes(tm, th, D, x.dtype, w_dtype, x.dtype)
    vmem_limit = int(min(budget, max(32 * 1024 * 1024, int(1.5 * est))))

    # NOTE: on v5e (128 MiB VMEM, 820 GB/s HBM) a third weight buffer
    # (pipeline_mode=pl.Buffered(3) on the two weight BlockSpecs) can hide the
    # per-row-tile weight refill bubble; left at the default double-buffering
    # here for portability.
    out = pl.pallas_call(
        _ffn_kernel,
        out_shape=jax.ShapeDtypeStruct((N, D), x.dtype),
        grid_spec=pltpu.PrefetchScalarGridSpec(
            num_scalar_prefetch=0,
            grid=(n_rows, n_h),
            in_specs=[
                pl.BlockSpec((tm, D), lambda i, j: (i, 0)),       # x tile
                pl.BlockSpec((1, D), lambda i, j: (0, 0)),        # gamma
                pl.BlockSpec((1, D), lambda i, j: (0, 0)),        # beta
                pl.BlockSpec((D, 2 * th), lambda i, j: (0, j)),   # fused up tile
                pl.BlockSpec((th, D), lambda i, j: (j, 0)),       # down tile
            ],
            out_specs=pl.BlockSpec((tm, D), lambda i, j: (i, 0)),
            scratch_shapes=[
                pltpu.VMEM((tm, D), jnp.float32),   # f32 accumulator
                pltpu.VMEM((tm, D), w_dtype),       # cached normalized x
            ],
        ),
        compiler_params=pltpu.CompilerParams(
            dimension_semantics=("parallel", "arbitrary"),
            vmem_limit_bytes=vmem_limit,
        ),
    )(x_flat, gamma2, beta2, w_fused, w_down)

    return out.reshape(B, S, D)


def feed_forward_ref(x, gamma, beta, w_up, w_down):
    """Pure-JAX reference matching the PyTorch module semantics."""
    xf = x.astype(jnp.float32)
    mean = jnp.mean(xf, axis=-1, keepdims=True)
    var = jnp.mean((xf - mean) ** 2, axis=-1, keepdims=True)
    xn = (xf - mean) / jnp.sqrt(var + LN_EPS) * gamma.astype(jnp.float32) \
        + beta.astype(jnp.float32)
    up = xn @ w_up.astype(jnp.float32)
    H = w_up.shape[1] // 2
    val, gate = up[..., :H], up[..., H:]
    act = val * (gate * jax.nn.sigmoid(gate))
    return (act @ w_down.astype(jnp.float32)).astype(x.dtype)


if __name__ == "__main__":
    key = jax.random.PRNGKey(0)
    # Small but alignment-friendly shapes: batch=2, seq=128, dim=128, hidden=256.
    B, S, D, H = 2, 128, 128, 256

    k_x, k_up, k_down = jax.random.split(key, 3)
    x = jax.random.normal(k_x, (B, S, D), dtype=jnp.float32)

    # Parameters (deterministic init). Shapes follow the module:
    #   norm: weight/bias (D,) -> ones / zeros (nn.LayerNorm default)
    #   up:   Linear(D, 2H, bias=False) stored transposed as (D, 2H)
    #   down: Linear(H, D, bias=False)  stored transposed as (H, D)
    # NOTE: the PyTorch module zero-inits `down` (output identically zero); we
    # use a small deterministic random init so the kernel hot path is exercised.
    gamma = jnp.ones((D,), jnp.float32)
    beta = jnp.zeros((D,), jnp.float32)
    w_up = jax.random.normal(k_up, (D, 2 * H), dtype=jnp.float32) * 0.05
    w_down = jax.random.normal(k_down, (H, D), dtype=jnp.float32) * 0.05

    # --- f32 correctness check (tight tolerance) ---
    out = jax.block_until_ready(feed_forward(x, gamma, beta, w_up, w_down))
    ref = feed_forward_ref(x, gamma, beta, w_up, w_down)
    np.testing.assert_allclose(np.asarray(out), np.asarray(ref),
                               rtol=1e-4, atol=1e-4)

    # --- bf16 end-to-end path (the production configuration) ---
    xb = x.astype(jnp.bfloat16)
    gb = gamma.astype(jnp.bfloat16)
    bb = beta.astype(jnp.bfloat16)
    wub = w_up.astype(jnp.bfloat16)
    wdb = w_down.astype(jnp.bfloat16)
    out_bf = jax.block_until_ready(feed_forward(xb, gb, bb, wub, wdb))
    ref_bf = feed_forward_ref(xb, gb, bb, wub, wdb)
    np.testing.assert_allclose(np.asarray(out_bf, dtype=np.float32),
                               np.asarray(ref_bf, dtype=np.float32),
                               rtol=5e-2, atol=3e-2)

    print("KERNEL_OK")
</pallas_src>

<mosaic_0001>
module attributes {stable_mosaic.version = 11 : i64} {
  func.func @_ffn_kernel(%arg0: i32, %arg1: i32, %arg2: memref<128x128xf32, #tpu.memory_space<vmem>>, %arg3: memref<1x128xf32, #tpu.memory_space<vmem>>, %arg4: memref<1x128xf32, #tpu.memory_space<vmem>>, %arg5: memref<128x512xf32, #tpu.memory_space<vmem>>, %arg6: memref<256x128xf32, #tpu.memory_space<vmem>>, %arg7: memref<128x128xf32, #tpu.memory_space<vmem>>, %arg8: memref<128x128xf32, #tpu.memory_space<vmem>>, %arg9: memref<128x128xf32, #tpu.memory_space<vmem>>) attributes {dimension_semantics = [#tpu.dimension_semantics<parallel>, #tpu.dimension_semantics<arbitrary>], iteration_bounds = array<i64: 2, 1>, scalar_prefetch = 0 : i64, scratch_operands = 2 : i64, tpu.core_type = #tpu.core_type<tc>, window_params = [{transform_indices = @transform_0, window_bounds = array<i64: 128, 128>}, {pipeline_mode = #tpu.pipeline_mode<synchronous>, transform_indices = @transform_1, window_bounds = array<i64: 1, 128>}, {pipeline_mode = #tpu.pipeline_mode<synchronous>, transform_indices = @transform_2, window_bounds = array<i64: 1, 128>}, {transform_indices = @transform_3, window_bounds = array<i64: 128, 512>}, {transform_indices = @transform_4, window_bounds = array<i64: 256, 128>}, {transform_indices = @transform_5, window_bounds = array<i64: 128, 128>}]} {
    %c0_i32 = arith.constant 0 : i32
    %0 = arith.cmpi eq, %arg1, %c0_i32 : i32
    %1 = arith.extui %0 : i1 to i32
    %c0_i32_0 = arith.constant 0 : i32
    %2 = arith.cmpi ne, %1, %c0_i32_0 : i32
    scf.if %2 {
      %cst_14 = arith.constant 0.000000e+00 : f32
      %23 = vector.broadcast %cst_14 : f32 to vector<128x128xf32>
      %c0_15 = arith.constant 0 : index
      %c0_16 = arith.constant 0 : index
      %24 = vector.load %arg8[%c0_15, %c0_16] : memref<128x128xf32, #tpu.memory_space<vmem>>, vector<128x128xf32>
      tpu.vector_store %arg8[%c0_15, %c0_16], %23 {strides = array<i32>} : memref<128x128xf32, #tpu.memory_space<vmem>>, vector<128x128xf32>,
      %c0_17 = arith.constant 0 : index
      %c0_18 = arith.constant 0 : index
      %25 = vector.load %arg2[%c0_17, %c0_18] : memref<128x128xf32, #tpu.memory_space<vmem>>, vector<128x128xf32>
      %cst_19 = arith.constant dense<0.000000e+00> : vector<128xf32>
      %26 = vector.multi_reduction <add>, %25, %cst_19 [1] : vector<128x128xf32> to vector<128xf32>
      %27 = vector.shape_cast %26 : vector<128xf32> to vector<128x1xf32>
      %cst_20 = arith.constant 1.280000e+02 : f32
      %28 = vector.broadcast %cst_20 : f32 to vector<128x1xf32>
      %29 = arith.divf %27, %28 : vector<128x1xf32>
      %30 = vector.broadcast %29 : vector<128x1xf32> to vector<128x128xf32>
      %31 = arith.subf %25, %30 : vector<128x128xf32>
      %32 = arith.mulf %31, %31 : vector<128x128xf32>
      %cst_21 = arith.constant dense<0.000000e+00> : vector<128xf32>
      %33 = vector.multi_reduction <add>, %32, %cst_21 [1] : vector<128x128xf32> to vector<128xf32>
      %34 = vector.shape_cast %33 : vector<128xf32> to vector<128x1xf32>
      %cst_22 = arith.constant 1.280000e+02 : f32
      %35 = vector.broadcast %cst_22 : f32 to vector<128x1xf32>
      %36 = arith.divf %34, %35 : vector<128x1xf32>
      %cst_23 = arith.constant 9.99999974E-6 : f32
      %37 = vector.broadcast %cst_23 : f32 to vector<128x1xf32>
      %38 = arith.addf %36, %37 : vector<128x1xf32>
      %39 = math.rsqrt %38 : vector<128x1xf32>
      %40 = vector.broadcast %39 : vector<128x1xf32> to vector<128x128xf32>
      %41 = arith.mulf %31, %40 : vector<128x128xf32>
      %c0_24 = arith.constant 0 : index
      %c0_25 = arith.constant 0 : index
      %42 = vector.load %arg3[%c0_24, %c0_25] : memref<1x128xf32, #tpu.memory_space<vmem>>, vector<1x128xf32>
      %43 = vector.broadcast %42 : vector<1x128xf32> to vector<128x128xf32>
      %44 = arith.mulf %41, %43 : vector<128x128xf32>
      %c0_26 = arith.constant 0 : index
      %c0_27 = arith.constant 0 : index
      %45 = vector.load %arg4[%c0_26, %c0_27] : memref<1x128xf32, #tpu.memory_space<vmem>>, vector<1x128xf32>
      %46 = vector.broadcast %45 : vector<1x128xf32> to vector<128x128xf32>
      %47 = arith.addf %44, %46 : vector<128x128xf32>
      %c0_28 = arith.constant 0 : index
      %c0_29 = arith.constant 0 : index
      %48 = vector.load %arg9[%c0_28, %c0_29] : memref<128x128xf32, #tpu.memory_space<vmem>>, vector<128x128xf32>
      tpu.vector_store %arg9[%c0_28, %c0_29], %47 {strides = array<i32>} : memref<128x128xf32, #tpu.memory_space<vmem>>, vector<128x128xf32>,
    } else {
    }
    %c0 = arith.constant 0 : index
    %c0_1 = arith.constant 0 : index
    %3 = vector.load %arg9[%c0, %c0_1] : memref<128x128xf32, #tpu.memory_space<vmem>>, vector<128x128xf32>
    %c0_2 = arith.constant 0 : index
    %c0_3 = arith.constant 0 : index
    %4 = vector.load %arg5[%c0_2, %c0_3] : memref<128x512xf32, #tpu.memory_space<vmem>>, vector<128x512xf32>
    %cst = arith.constant dense<0.000000e+00> : vector<128x512xf32>
    %5 = tpu.matmul %3, %4, %cst {dimension_numbers = #tpu.dot_dimension_numbers<[1], [0], [0], [1], [0, 0, 1, 1], [], []>} : vector<128x128xf32>, vector<128x512xf32>, vector<128x512xf32> -> vector<128x512xf32>
    %6 = vector.extract_strided_slice %5 {offsets = [0, 0], sizes = [128, 256], strides = [1, 1]} : vector<128x512xf32> to vector<128x256xf32>
    %7 = vector.extract_strided_slice %5 {offsets = [0, 256], sizes = [128, 256], strides = [1, 1]} : vector<128x512xf32> to vector<128x256xf32>
    %8 = arith.negf %7 : vector<128x256xf32>
    %9 = math.exp %8 : vector<128x256xf32>
    %cst_4 = arith.constant 1.000000e+00 : f32
    %10 = vector.broadcast %cst_4 : f32 to vector<128x256xf32>
    %11 = arith.addf %10, %9 : vector<128x256xf32>
    %12 = arith.divf %10, %11 : vector<128x256xf32>
    %13 = arith.mulf %7, %12 : vector<128x256xf32>
    %14 = arith.mulf %6, %13 : vector<128x256xf32>
    %c0_5 = arith.constant 0 : index
    %c0_6 = arith.constant 0 : index
    %15 = vector.load %arg8[%c0_5, %c0_6] : memref<128x128xf32, #tpu.memory_space<vmem>>, vector<128x128xf32>
    %c0_7 = arith.constant 0 : index
    %c0_8 = arith.constant 0 : index
    %16 = vector.load %arg6[%c0_7, %c0_8] : memref<256x128xf32, #tpu.memory_space<vmem>>, vector<256x128xf32>
    %cst_9 = arith.constant dense<0.000000e+00> : vector<128x128xf32>
    %17 = tpu.matmul %14, %16, %cst_9 {dimension_numbers = #tpu.dot_dimension_numbers<[1], [0], [0], [1], [0, 0, 1, 1], [], []>} : vector<128x256xf32>, vector<256x128xf32>, vector<128x128xf32> -> vector<128x128xf32>
    %18 = arith.addf %15, %17 : vector<128x128xf32>
    %c0_10 = arith.constant 0 : index
    %c0_11 = arith.constant 0 : index
    %19 = vector.load %arg8[%c0_10, %c0_11] : memref<128x128xf32, #tpu.memory_space<vmem>>, vector<128x128xf32>
    tpu.vector_store %arg8[%c0_10, %c0_11], %18 {strides = array<i32>} : memref<128x128xf32, #tpu.memory_space<vmem>>, vector<128x128xf32>,
    %c0_i32_12 = arith.constant 0 : i32
    %20 = arith.cmpi eq, %arg1, %c0_i32_12 : i32
    %21 = arith.extui %20 : i1 to i32
    %c0_i32_13 = arith.constant 0 : i32
    %22 = arith.cmpi ne, %21, %c0_i32_13 : i32
    scf.if %22 {
      %c0_14 = arith.constant 0 : index
      %c0_15 = arith.constant 0 : index
      %23 = vector.load %arg8[%c0_14, %c0_15] : memref<128x128xf32, #tpu.memory_space<vmem>>, vector<128x128xf32>
      %c0_16 = arith.constant 0 : index
      %c0_17 = arith.constant 0 : index
      %24 = vector.load %arg7[%c0_16, %c0_17] : memref<128x128xf32, #tpu.memory_space<vmem>>, vector<128x128xf32>
      tpu.vector_store %arg7[%c0_16, %c0_17], %23 {strides = array<i32>} : memref<128x128xf32, #tpu.memory_space<vmem>>, vector<128x128xf32>,
    } else {
    }
    return
  }
  func.func @transform_0(%arg0: i32, %arg1: i32) -> (i32, i32) {
    %c0_i32 = arith.constant 0 : i32
    %c0_i32_0 = arith.constant 0 : i32
    return %arg0, %c0_i32 : i32, i32
  }
  func.func @transform_1(%arg0: i32, %arg1: i32) -> (i32, i32) {
    %c0_i32 = arith.constant 0 : i32
    %c0_i32_0 = arith.constant 0 : i32
    %c0_i32_1 = arith.constant 0 : i32
    return %c0_i32, %c0_i32_0 : i32, i32
  }
  func.func @transform_2(%arg0: i32, %arg1: i32) -> (i32, i32) {
    %c0_i32 = arith.constant 0 : i32
    %c0_i32_0 = arith.constant 0 : i32
    %c0_i32_1 = arith.constant 0 : i32
    return %c0_i32, %c0_i32_0 : i32, i32
  }
  func.func @transform_3(%arg0: i32, %arg1: i32) -> (i32, i32) {
    %c0_i32 = arith.constant 0 : i32
    %c0_i32_0 = arith.constant 0 : i32
    return %c0_i32, %arg1 : i32, i32
  }
  func.func @transform_4(%arg0: i32, %arg1: i32) -> (i32, i32) {
    %c0_i32 = arith.constant 0 : i32
    %c0_i32_0 = arith.constant 0 : i32
    return %arg1, %c0_i32 : i32, i32
  }
  func.func @transform_5(%arg0: i32, %arg1: i32) -> (i32, i32) {
    %c0_i32 = arith.constant 0 : i32
    %c0_i32_0 = arith.constant 0 : i32
    return %arg0, %c0_i32 : i32, i32
  }
}

</mosaic_0001>

<llo_original>
// kernel: tpu_custom_call.1
$region0: #{tpu_custom_call.1}
  #allocation0 [shape = 'u32[]', space=smem, size = 0x4, offset = 0x4, fixed_abs, tag = 'smem constant byte address 0x4 - core index']
  #allocation1 [shape = 'u32[144,128]{1,0:T(1,128)}', space=vmem, size = 0x12000, scoped, tag = 'internal scratch']
  #allocation2 [shape = 'f32[128,128]{1,0:T(8,128)}', space=vmem, size = 0x10000, scoped, tag = 'scratch operand']
  #allocation3 [shape = 'f32[128,128]{1,0:T(8,128)}', space=vmem, size = 0x10000, scoped, tag = 'scratch operand']
  %s0 = inlined_call_operand.hbm [shape: f32[256,128], index: 0, kind: input, shape index: {}]
  %s1 = inlined_call_operand.vmem [shape: f32[1,128], index: 1, kind: input, shape index: {}]
  %s2 = inlined_call_operand.vmem [shape: f32[1,128], index: 2, kind: input, shape index: {}]
  %s3 = inlined_call_operand.hbm [shape: f32[128,512], index: 3, kind: input, shape index: {}]
  %s4 = inlined_call_operand.hbm [shape: f32[256,128], index: 4, kind: input, shape index: {}]
  %s5 = inlined_call_operand.hbm [shape: f32[256,128], index: 5, kind: output, shape index: {}]
  %s6 = sld [smem:[#allocation0]]
  $region73: #{tpu_custom_call.1} parent=0
    _
  %s8 = ssub.s32 1, %s6
  %s9 = scalar_select 0, %s8, %s6
  $region1: #{tpu_custom_call.1} parent=0
    #allocation4 [shape = 'u8[131072]{0}', space=vmem, size = 0x20000, scoped, tag = 'input window, operand 0']
    #allocation5 [shape = 's32[2]{0}', space=sflag, size = 0x8, scoped, tag = 'scoped memory for tpu_custom_call.1']
    #allocation6 [shape = 's32[2]{0}', space=sflag, size = 0x8, scoped, tag = 'scoped memory for tpu_custom_call.1']
    #allocation7 [shape = 'u8[262144]{0}', space=vmem, size = 0x40000, scoped, tag = 'input window, operand 3, single buffered']
    #allocation8 [shape = 's32[1]{0}', space=sflag, size = 0x4, scoped, tag = 'scoped memory for tpu_custom_call.1']
    #allocation9 [shape = 'u8[131072]{0}', space=vmem, size = 0x20000, scoped, tag = 'input window, operand 4, single buffered']
    #allocation10 [shape = 'u8[131072]{0}', space=vmem, size = 0x20000, scoped, tag = 'output window, operand 0']
    %10 = vsyncpa [#allocation5], 0
    %s11 = scalar_lea.sflag [#allocation5], 1
    %12 = vsyncpa %s11, 0
    %13 = vsyncpa [#allocation8], 0
    %14 = vsyncpa [#allocation6], 0
    %s15 = scalar_lea.sflag [#allocation6], 1
    %16 = vsyncpa %s15, 0
    loop: start=0, step=1, limit=4
    $region2: #{tpu_custom_call.1} parent=1 // loop_pre_header
      _
    $region3: #{tpu_custom_call.1} parent=1 // loop_header
      %s18 = sphi 0, %s22
      %p19 = scmp.ge.s32.totalorder %s18, 4
      %s25 = sphi 0, %s37
      %s26 = sphi 0, %s33
      %s27 = sphi 0, %s25
      %s28 = sphi 0, %s26
      %s29 = sphi 0, %s27
      %s30 = sphi 0, %s28
      %s40 = sphi 0, %s42
      %s43 = sphi 0, %s40
      %s44 = sphi 0, %s43
      %s60 = sphi 0, %s44
      %s64 = sphi 0, %s64
      %s66 = sphi 0, %s64
      %s67 = sphi 0, %s66
      %s81 = sphi 0, %s67
      %s85 = sphi 0, %s85
      %s87 = sphi 0, %s85
      %s88 = sphi 0, %s87
      %s102 = sphi 0, %s88
      %s108 = sphi 0, %s110
      %s111 = sphi 0, %s108
      %s112 = sphi 0, %s111
      %s128 = sphi 0, %s112
      %s134 = sphi 0, %s136
      %s137 = sphi 0, %s134
      %s138 = sphi 0, %s137
      %s154 = sphi 0, %s138
      %s160 = sphi 0, %s162
      %s163 = sphi 0, %s160
      %s164 = sphi 0, %s163
      %s180 = sphi 0, %s164
    $region4: #{tpu_custom_call.1} parent=1 // loop_header_branch
      %21 = sbr.rel (%p19) target = $region8
    $region5: #{tpu_custom_call.1} parent=1 // loop_body
      %s23 = ssub.s32 %s18, 1
      %s24 = ssub.s32 %s18, 2
      %s31 = sadd.s32 1, %s26
      %p32 = scmp.ge.s32.totalorder %s31, 1
      %s33 = scalar_select %p32, 0, %s31
      %s34 = sadd.s32 1, %s25
      %s35 = scalar_select %p32, %s34, %s25
      %p36 = scmp.ge.s32.totalorder %s35, 2
      %s37 = scalar_select %p36, 0, %s35
      %s38 = ssub.s32 %s25, %s37
      %p39 = scmp.eq.s32.totalorder %s38, 0
      %s41 = sadd.s32 %s40, 1
      %s42 = scalar_select %p39, %s40, %s41
      %p45 = pneg %p39
      %p46 = scmp.eq.s32.totalorder %s18, 1
      %p47 = por %p45, %p46
      %p48 = scmp.ne.s32.totalorder %s40, %s43
      %p49 = scmp.eq.s32.totalorder %s18, 0
      %p50 = por %p48, %p49
      %p51 = scmp.ne.s32.totalorder %s40, %s43
      %p52 = scmp.eq.s32.totalorder %s23, 1
      %p53 = por %p51, %p52
      %p54 = scmp.ne.s32.totalorder %s43, %s44
      %p55 = scmp.eq.s32.totalorder %s23, 0
      %p56 = por %p54, %p55
      %p57 = scmp.ne.s32.totalorder %s43, %s44
      %p58 = scmp.eq.s32.totalorder %s24, 1
      %p59 = por %p57, %p58
      %p61 = scmp.ne.s32.totalorder %s44, %s60
      %p62 = scmp.eq.s32.totalorder %s24, 0
      %p63 = por %p61, %p62
      %s65 = sadd.s32 %s64, 1
      %p68 = scmp.eq.s32.totalorder %s18, 1
      %p69 = scmp.ne.s32.totalorder %s64, %s66
      %p70 = scmp.eq.s32.totalorder %s18, 0
      %p71 = por %p69, %p70
      %p72 = scmp.ne.s32.totalorder %s64, %s66
      %p73 = scmp.eq.s32.totalorder %s23, 1
      %p74 = por %p72, %p73
      %p75 = scmp.ne.s32.totalorder %s66, %s67
      %p76 = scmp.eq.s32.totalorder %s23, 0
      %p77 = por %p75, %p76
      %p78 = scmp.ne.s32.totalorder %s66, %s67
      %p79 = scmp.eq.s32.totalorder %s24, 1
      %p80 = por %p78, %p79
      %p82 = scmp.ne.s32.totalorder %s67, %s81
      %p83 = scmp.eq.s32.totalorder %s24, 0
      %p84 = por %p82, %p83
      %s86 = sadd.s32 %s85, 1
      %p89 = scmp.eq.s32.totalorder %s18, 1
      %p90 = scmp.ne.s32.totalorder %s85, %s87
      %p91 = scmp.eq.s32.totalorder %s18, 0
      %p92 = por %p90, %p91
      %p93 = scmp.ne.s32.totalorder %s85, %s87
      %p94 = scmp.eq.s32.totalorder %s23, 1
      %p95 = por %p93, %p94
      %p96 = scmp.ne.s32.totalorder %s87, %s88
      %p97 = scmp.eq.s32.totalorder %s23, 0
      %p98 = por %p96, %p97
      %p99 = scmp.ne.s32.totalorder %s87, %s88
      %p100 = scmp.eq.s32.totalorder %s24, 1
      %p101 = por %p99, %p100
      %p103 = scmp.ne.s32.totalorder %s88, %s102
      %p104 = scmp.eq.s32.totalorder %s24, 0
      %p105 = por %p103, %p104
      %s106 = ssub.s32 %s26, %s33
      %p107 = scmp.eq.s32.totalorder %s106, 0
      %s109 = sadd.s32 %s108, 1
      %s110 = scalar_select %p107, %s108, %s109
      %p113 = pneg %p107
      %p114 = scmp.eq.s32.totalorder %s18, 1
      %p115 = por %p113, %p114
      %p116 = scmp.ne.s32.totalorder %s108, %s111
      %p117 = scmp.eq.s32.totalorder %s18, 0
      %p118 = por %p116, %p117
      %p119 = scmp.ne.s32.totalorder %s108, %s111
      %p120 = scmp.eq.s32.totalorder %s23, 1
      %p121 = por %p119, %p120
      %p122 = scmp.ne.s32.totalorder %s111, %s112
      %p123 = scmp.eq.s32.totalorder %s23, 0
      %p124 = por %p122, %p123
      %p125 = scmp.ne.s32.totalorder %s111, %s112
      %p126 = scmp.eq.s32.totalorder %s24, 1
      %p127 = por %p125, %p126
      %p129 = scmp.ne.s32.totalorder %s112, %s128
      %p130 = scmp.eq.s32.totalorder %s24, 0
      %p131 = por %p129, %p130
      %s132 = ssub.s32 %s26, %s33
      %p133 = scmp.eq.s32.totalorder %s132, 0
      %s135 = sadd.s32 %s134, 1
      %s136 = scalar_select %p133, %s134, %s135
      %p139 = pneg %p133
      %p140 = scmp.eq.s32.totalorder %s18, 1
      %p141 = por %p139, %p140
      %p142 = scmp.ne.s32.totalorder %s134, %s137
      %p143 = scmp.eq.s32.totalorder %s18, 0
      %p144 = por %p142, %p143
      %p145 = scmp.ne.s32.totalorder %s134, %s137
      %p146 = scmp.eq.s32.totalorder %s23, 1
      %p147 = por %p145, %p146
      %p148 = scmp.ne.s32.totalorder %s137, %s138
      %p149 = scmp.eq.s32.totalorder %s23, 0
      %p150 = por %p148, %p149
      %p151 = scmp.ne.s32.totalorder %s137, %s138
      %p152 = scmp.eq.s32.totalorder %s24, 1
      %p153 = por %p151, %p152
      %p155 = scmp.ne.s32.totalorder %s138, %s154
      %p156 = scmp.eq.s32.totalorder %s24, 0
      %p157 = por %p155, %p156
      %s158 = ssub.s32 %s25, %s37
      %p159 = scmp.eq.s32.totalorder %s158, 0
      %s161 = sadd.s32 %s160, 1
      %s162 = scalar_select %p159, %s160, %s161
      %p165 = pneg %p159
      %p166 = scmp.eq.s32.totalorder %s18, 1
      %p167 = por %p165, %p166
      %p168 = scmp.ne.s32.totalorder %s160, %s163
      %p169 = scmp.eq.s32.totalorder %s18, 0
      %p170 = por %p168, %p169
      %p171 = scmp.ne.s32.totalorder %s160, %s163
      %p172 = scmp.eq.s32.totalorder %s23, 1
      %p173 = por %p171, %p172
      %p174 = scmp.ne.s32.totalorder %s163, %s164
      %p175 = scmp.eq.s32.totalorder %s23, 0
      %p176 = por %p174, %p175
      %p177 = scmp.ne.s32.totalorder %s163, %s164
      %p178 = scmp.eq.s32.totalorder %s24, 1
      %p179 = por %p177, %p178
      %p181 = scmp.ne.s32.totalorder %s164, %s180
      %p182 = scmp.eq.s32.totalorder %s24, 0
      %p183 = por %p181, %p182
      %p184 = scmp.le.s32.totalorder 1, %s18
      %p185 = scmp.lt.s32.totalorder %s18, 3
      %p186 = pnand %p184, %p185
      %p187 = pneg %p186
      // Predicated region
      $region9: #{tpu_custom_call.1} parent=5 // pred_check
        _
      $region10: #{tpu_custom_call.1} parent=5 // pred_check_branch
        %189 = sbr.rel (%p186) target = $region12
      $region11: #{tpu_custom_call.1} parent=5 // pred_region
        %s190 = ssub.s32 %s18, 1
        // Predicated region
        $region13: #{tpu_custom_call.1} parent=11 // pred_check
          %p191 = pneg %p77
        $region14: #{tpu_custom_call.1} parent=11 // pred_check_branch
          %193 = sbr.rel (%p191) target = $region16
        $region15: #{tpu_custom_call.1} parent=11 // pred_region
          _
        $region16: #{tpu_custom_call.1} parent=11 // pred_fallthru
          _
        // Predicated region
        $region17: #{tpu_custom_call.1} parent=11 // pred_check
          %p194 = pneg %p98
        $region18: #{tpu_custom_call.1} parent=11 // pred_check_branch
          %196 = sbr.rel (%p194) target = $region20
        $region19: #{tpu_custom_call.1} parent=11 // pred_region
          _
        $region20: #{tpu_custom_call.1} parent=11 // pred_fallthru
          _
        // Predicated region
        $region21: #{tpu_custom_call.1} parent=11 // pred_check
          %p197 = pneg %p124
        $region22: #{tpu_custom_call.1} parent=11 // pred_check_branch
          %199 = sbr.rel (%p197) target = $region24
        $region23: #{tpu_custom_call.1} parent=11 // pred_region
          %s200 = smul.u32 4, %s28
          %s202 = ssub.s32 8192, 8192
          %203 = vsyncadd [#allocation8], %s202
          %s204 = smul.addr %s200, 128
          %s205 = scalar_lea.hbm %s3, %s204
          %s206 = sshll.u32 [#allocation7], 4
          %s207 = int_to_ptr.vmem [resolvable:$true] %s206
          %212 = dma.hbm_to_vmem [thread:$0]  %s205, 8192, %s207, [#allocation8], 512, 512, 32
        $region24: #{tpu_custom_call.1} parent=11 // pred_fallthru
          _
        // Predicated region
        $region25: #{tpu_custom_call.1} parent=11 // pred_check
          %p213 = pneg %p150
        $region26: #{tpu_custom_call.1} parent=11 // pred_check_branch
          %215 = sbr.rel (%p213) target = $region28
        $region27: #{tpu_custom_call.1} parent=11 // pred_region
          %s216 = smul.u32 32, %s28
          %s218 = ssub.s32 4096, 4096
          %219 = vsyncadd [#allocation8], %s218
          %s220 = smul.addr %s216, 128
          %s221 = scalar_lea.hbm %s4, %s220
          %s222 = sshll.u32 [#allocation9], 4
          %s223 = int_to_ptr.vmem [resolvable:$true] %s222
          %228 = dma.hbm_to_vmem [thread:$0]  %s221, 4096, %s223, [#allocation8], 128, 128, 8
        $region28: #{tpu_custom_call.1} parent=11 // pred_fallthru
          _
      $region12: #{tpu_custom_call.1} parent=5 // pred_fallthru
        _
      %p229 = scmp.lt.s32.totalorder %s18, 2
      // Predicated region
      $region29: #{tpu_custom_call.1} parent=5 // pred_check
        %p230 = pneg %p229
      $region30: #{tpu_custom_call.1} parent=5 // pred_check_branch
        %232 = sbr.rel (%p230) target = $region32
      $region31: #{tpu_custom_call.1} parent=5 // pred_region
        // Predicated region
        $region33: #{tpu_custom_call.1} parent=31 // pred_check
          %p233 = pneg %p50
        $region34: #{tpu_custom_call.1} parent=31 // pred_check_branch
          %235 = sbr.rel (%p233) target = $region36
        $region35: #{tpu_custom_call.1} parent=31 // pred_region
          %s236 = sand.u32 %s40, 1
          %s237 = scalar_lea.sflag [#allocation5], %s236
          %s238 = sand.u32 %s40, 1
          %s239 = smul.addr %s238, 128
          %s240 = scalar_lea.vmem [#allocation4], %s239
          %s241 = smul.u32 16, %s25
          %s243 = ssub.s32 2048, 2048
          %244 = vsyncadd %s237, %s243
          %s245 = smul.addr %s241, 128
          %s246 = scalar_lea.hbm %s0, %s245
          %s247 = sshll.u32 %s240, 4
          %s248 = int_to_ptr.vmem [resolvable:$true] %s247
          %253 = dma.hbm_to_vmem [thread:$0]  %s246, 2048, %s248, %s237, 128, 128, 8
        $region36: #{tpu_custom_call.1} parent=31 // pred_fallthru
          _
      $region32: #{tpu_custom_call.1} parent=5 // pred_fallthru
        _
      %p254 = scmp.le.s32.totalorder 1, %s18
      %p255 = scmp.lt.s32.totalorder %s18, 3
      %p256 = pnand %p254, %p255
      %p257 = pneg %p256
      // Predicated region
      $region37: #{tpu_custom_call.1} parent=5 // pred_check
        _
      $region38: #{tpu_custom_call.1} parent=5 // pred_check_branch
        %259 = sbr.rel (%p256) target = $region40
      $region39: #{tpu_custom_call.1} parent=5 // pred_region
        %s260 = ssub.s32 %s18, 1
        %s261 = sand.u32 %s43, 1
        %s262 = scalar_lea.sflag [#allocation5], %s261
        %s263 = sand.u32 %s43, 1
        %s264 = smul.addr %s263, 128
        %s265 = scalar_lea.vmem [#allocation4], %s264
        // Predicated region
        $region41: #{tpu_custom_call.1} parent=39 // pred_check
          %p266 = pneg %p56
        $region42: #{tpu_custom_call.1} parent=39 // pred_check_branch
          %268 = sbr.rel (%p266) target = $region44
        $region43: #{tpu_custom_call.1} parent=39 // pred_region
          %269 = dma.done %s262, 2048
        $region44: #{tpu_custom_call.1} parent=39 // pred_fallthru
          _
        // Predicated region
        $region45: #{tpu_custom_call.1} parent=39 // pred_check
          %p270 = pneg %p124
        $region46: #{tpu_custom_call.1} parent=39 // pred_check_branch
          %272 = sbr.rel (%p270) target = $region48
        $region47: #{tpu_custom_call.1} parent=39 // pred_region
          %273 = dma.done [#allocation8], 8192
        $region48: #{tpu_custom_call.1} parent=39 // pred_fallthru
          _
        // Predicated region
        $region49: #{tpu_custom_call.1} parent=39 // pred_check
          %p274 = pneg %p150
        $region50: #{tpu_custom_call.1} parent=39 // pred_check_branch
          %276 = sbr.rel (%p274) target = $region52
        $region51: #{tpu_custom_call.1} parent=39 // pred_region
          %277 = dma.done [#allocation8], 4096
        $region52: #{tpu_custom_call.1} parent=39 // pred_fallthru
          _
        %s278 = sand.u32 %s43, 1
        %s279 = scalar_lea.sflag [#allocation5], %s278
        %s280 = sand.u32 %s43, 1
        %s281 = smul.addr %s280, 128
        %s282 = scalar_lea.vmem [#allocation4], %s281
        %p283 = pneg %p56
        %p284 = pneg %p53
        %p285 = pneg %p77
        %p286 = pneg %p74
        %p287 = pneg %p98
        %p288 = pneg %p95
        %p289 = pneg %p124
        %p290 = pneg %p121
        %p291 = pneg %p150
        %p292 = pneg %p147
        %p293 = pneg %p176
        %p294 = pneg %p173
        %s295 = sand.u32 %s163, 1
        %s296 = scalar_lea.sflag [#allocation6], %s295
        %s297 = sand.u32 %s163, 1
        %s298 = smul.addr %s297, 128
        %s299 = scalar_lea.vmem [#allocation10], %s298
        %s300 = smul.u32 16, %s27
        %s301 = smul.u32 4, %s28
        %s302 = smul.u32 32, %s28
        %s303 = smul.u32 16, %s27
        %p304 = scmp.eq.s32.totalorder %s28, 0
        // Predicated region
        $region53: #{tpu_custom_call.1} parent=39 // pred_check
          %p305 = pneg %p304
        $region54: #{tpu_custom_call.1} parent=39 // pred_check_branch
          %307 = sbr.rel (%p305) target = $region56
        $region55: #{tpu_custom_call.1} parent=39 // pred_region
          %308 = vst [vmem:[#allocation2] sm:$0xff] 0.0
          %309 = vst [vmem:[#allocation2 + $0x8] sm:$0xff] 0.0
          %310 = vst [vmem:[#allocation2 + $0x10] sm:$0xff] 0.0
          %311 = vst [vmem:[#allocation2 + $0x18] sm:$0xff] 0.0
          %312 = vst [vmem:[#allocation2 + $0x20] sm:$0xff] 0.0
          %313 = vst [vmem:[#allocation2 + $0x28] sm:$0xff] 0.0
          %314 = vst [vmem:[#allocation2 + $0x30] sm:$0xff] 0.0
          %315 = vst [vmem:[#allocation2 + $0x38] sm:$0xff] 0.0
          %316 = vst [vmem:[#allocation2 + $0x40] sm:$0xff] 0.0
          %317 = vst [vmem:[#allocation2 + $0x48] sm:$0xff] 0.0
          %318 = vst [vmem:[#allocation2 + $0x50] sm:$0xff] 0.0
          %319 = vst [vmem:[#allocation2 + $0x58] sm:$0xff] 0.0
          %320 = vst [vmem:[#allocation2 + $0x60] sm:$0xff] 0.0
          %321 = vst [vmem:[#allocation2 + $0x68] sm:$0xff] 0.0
          %322 = vst [vmem:[#allocation2 + $0x70] sm:$0xff] 0.0
          %323 = vst [vmem:[#allocation2 + $0x78] sm:$0xff] 0.0
          %v324 = vld [vmem:[%s265] sm:$0xff]
          %v325 = vld [vmem:[%s265 + $0x8] sm:$0xff]
          %v326 = vld [vmem:[%s265 + $0x10] sm:$0xff]
          %v327 = vld [vmem:[%s265 + $0x18] sm:$0xff]
          %v328 = vld [vmem:[%s265 + $0x20] sm:$0xff]
          %v329 = vld [vmem:[%s265 + $0x28] sm:$0xff]
          %v330 = vld [vmem:[%s265 + $0x30] sm:$0xff]
          %v331 = vld [vmem:[%s265 + $0x38] sm:$0xff]
          %v332 = vld [vmem:[%s265 + $0x40] sm:$0xff]
          %v333 = vld [vmem:[%s265 + $0x48] sm:$0xff]
          %v334 = vld [vmem:[%s265 + $0x50] sm:$0xff]
          %v335 = vld [vmem:[%s265 + $0x58] sm:$0xff]
          %v336 = vld [vmem:[%s265 + $0x60] sm:$0xff]
          %v337 = vld [vmem:[%s265 + $0x68] sm:$0xff]
          %v338 = vld [vmem:[%s265 + $0x70] sm:$0xff]
          %v339 = vld [vmem:[%s265 + $0x78] sm:$0xff]
          %340 = vadd.xlane.f32.xlu0 %v324
          %v341 = vpop.xlane.xlu0 %340
          %342 = vadd.xlane.f32.xlu0 %v325
          %v343 = vpop.xlane.xlu0 %342
          %344 = vadd.xlane.f32.xlu0 %v326
          %v345 = vpop.xlane.xlu0 %344
          %346 = vadd.xlane.f32.xlu0 %v327
          %v347 = vpop.xlane.xlu0 %346
          %348 = vadd.xlane.f32.xlu0 %v328
          %v349 = vpop.xlane.xlu0 %348
          %350 = vadd.xlane.f32.xlu0 %v329
          %v351 = vpop.xlane.xlu0 %350
          %352 = vadd.xlane.f32.xlu0 %v330
          %v353 = vpop.xlane.xlu0 %352
          %354 = vadd.xlane.f32.xlu0 %v331
          %v355 = vpop.xlane.xlu0 %354
          %356 = vadd.xlane.f32.xlu0 %v332
          %v357 = vpop.xlane.xlu0 %356
          %358 = vadd.xlane.f32.xlu0 %v333
          %v359 = vpop.xlane.xlu0 %358
          %360 = vadd.xlane.f32.xlu0 %v334
          %v361 = vpop.xlane.xlu0 %360
          %362 = vadd.xlane.f32.xlu0 %v335
          %v363 = vpop.xlane.xlu0 %362
          %364 = vadd.xlane.f32.xlu0 %v336
          %v365 = vpop.xlane.xlu0 %364
          %366 = vadd.xlane.f32.xlu0 %v337
          %v367 = vpop.xlane.xlu0 %366
          %368 = vadd.xlane.f32.xlu0 %v338
          %v369 = vpop.xlane.xlu0 %368
          %370 = vadd.xlane.f32.xlu0 %v339
          %v371 = vpop.xlane.xlu0 %370
          %v372 = vrcp.pop 128.0
          %v373 = vmul.f32 %v341, %v372
          %v374 = vmul.f32 %v343, %v372
          %v375 = vmul.f32 %v345, %v372
          %v376 = vmul.f32 %v347, %v372
          %v377 = vmul.f32 %v349, %v372
          %v378 = vmul.f32 %v351, %v372
          %v379 = vmul.f32 %v353, %v372
          %v380 = vmul.f32 %v355, %v372
          %v381 = vmul.f32 %v357, %v372
          %v382 = vmul.f32 %v359, %v372
          %v383 = vmul.f32 %v361, %v372
          %v384 = vmul.f32 %v363, %v372
          %v385 = vmul.f32 %v365, %v372
          %v386 = vmul.f32 %v367, %v372
          %v387 = vmul.f32 %v369, %v372
          %v388 = vmul.f32 %v371, %v372
          %v389 = vsub.f32 %v324, %v373
          %v390 = vsub.f32 %v325, %v374
          %v391 = vsub.f32 %v326, %v375
          %v392 = vsub.f32 %v327, %v376
          %v393 = vsub.f32 %v328, %v377
          %v394 = vsub.f32 %v329, %v378
          %v395 = vsub.f32 %v330, %v379
          %v396 = vsub.f32 %v331, %v380
          %v397 = vsub.f32 %v332, %v381
          %v398 = vsub.f32 %v333, %v382
          %v399 = vsub.f32 %v334, %v383
          %v400 = vsub.f32 %v335, %v384
          %v401 = vsub.f32 %v336, %v385
          %v402 = vsub.f32 %v337, %v386
          %v403 = vsub.f32 %v338, %v387
          %v404 = vsub.f32 %v339, %v388
          %v405 = vmul.f32 %v389, %v389
          %v406 = vmul.f32 %v390, %v390
          %v407 = vmul.f32 %v391, %v391
          %v408 = vmul.f32 %v392, %v392
          %v409 = vmul.f32 %v393, %v393
          %v410 = vmul.f32 %v394, %v394
          %v411 = vmul.f32 %v395, %v395
          %v412 = vmul.f32 %v396, %v396
          %v413 = vmul.f32 %v397, %v397
          %v414 = vmul.f32 %v398, %v398
          %v415 = vmul.f32 %v399, %v399
          %v416 = vmul.f32 %v400, %v400
          %v417 = vmul.f32 %v401, %v401
          %v418 = vmul.f32 %v402, %v402
          %v419 = vmul.f32 %v403, %v403
          %v420 = vmul.f32 %v404, %v404
          %421 = vadd.xlane.f32.xlu0 %v405
          %v422 = vpop.xlane.xlu0 %421
          %423 = vadd.xlane.f32.xlu0 %v406
          %v424 = vpop.xlane.xlu0 %423
          %425 = vadd.xlane.f32.xlu0 %v407
          %v426 = vpop.xlane.xlu0 %425
          %427 = vadd.xlane.f32.xlu0 %v408
          %v428 = vpop.xlane.xlu0 %427
          %429 = vadd.xlane.f32.xlu0 %v409
          %v430 = vpop.xlane.xlu0 %429
          %431 = vadd.xlane.f32.xlu0 %v410
          %v432 = vpop.xlane.xlu0 %431
          %433 = vadd.xlane.f32.xlu0 %v411
          %v434 = vpop.xlane.xlu0 %433
          %435 = vadd.xlane.f32.xlu0 %v412
          %v436 = vpop.xlane.xlu0 %435
          %437 = vadd.xlane.f32.xlu0 %v413
          %v438 = vpop.xlane.xlu0 %437
          %439 = vadd.xlane.f32.xlu0 %v414
          %v440 = vpop.xlane.xlu0 %439
          %441 = vadd.xlane.f32.xlu0 %v415
          %v442 = vpop.xlane.xlu0 %441
          %443 = vadd.xlane.f32.xlu0 %v416
          %v444 = vpop.xlane.xlu0 %443
          %445 = vadd.xlane.f32.xlu0 %v417
          %v446 = vpop.xlane.xlu0 %445
          %447 = vadd.xlane.f32.xlu0 %v418
          %v448 = vpop.xlane.xlu0 %447
          %449 = vadd.xlane.f32.xlu0 %v419
          %v450 = vpop.xlane.xlu0 %449
          %451 = vadd.xlane.f32.xlu0 %v420
          %v452 = vpop.xlane.xlu0 %451
          %v453 = vmul.f32 %v422, %v372
          %v454 = vmul.f32 %v424, %v372
          %v455 = vmul.f32 %v426, %v372
          %v456 = vmul.f32 %v428, %v372
          %v457 = vmul.f32 %v430, %v372
          %v458 = vmul.f32 %v432, %v372
          %v459 = vmul.f32 %v434, %v372
          %v460 = vmul.f32 %v436, %v372
          %v461 = vmul.f32 %v438, %v372
          %v462 = vmul.f32 %v440, %v372
          %v463 = vmul.f32 %v442, %v372
          %v464 = vmul.f32 %v444, %v372
          %v465 = vmul.f32 %v446, %v372
          %v466 = vmul.f32 %v448, %v372
          %v467 = vmul.f32 %v450, %v372
          %v468 = vmul.f32 %v452, %v372
          %v469 = vadd.f32 %v453, 1e-05
          %v470 = vadd.f32 %v454, 1e-05
          %v471 = vadd.f32 %v455, 1e-05
          %v472 = vadd.f32 %v456, 1e-05
          %v473 = vadd.f32 %v457, 1e-05
          %v474 = vadd.f32 %v458, 1e-05
          %v475 = vadd.f32 %v459, 1e-05
          %v476 = vadd.f32 %v460, 1e-05
          %v477 = vadd.f32 %v461, 1e-05
          %v478 = vadd.f32 %v462, 1e-05
          %v479 = vadd.f32 %v463, 1e-05
          %v480 = vadd.f32 %v464, 1e-05
          %v481 = vadd.f32 %v465, 1e-05
          %v482 = vadd.f32 %v466, 1e-05
          %v483 = vadd.f32 %v467, 1e-05
          %v484 = vadd.f32 %v468, 1e-05
          %v485 = vrsqrt.pop %v469
          %v486 = vrsqrt.pop %v470
          %v487 = vrsqrt.pop %v471
          %v488 = vrsqrt.pop %v472
          %v489 = vrsqrt.pop %v473
          %v490 = vrsqrt.pop %v474
          %v491 = vrsqrt.pop %v475
          %v492 = vrsqrt.pop %v476
          %v493 = vrsqrt.pop %v477
          %v494 = vrsqrt.pop %v478
          %v495 = vrsqrt.pop %v479
          %v496 = vrsqrt.pop %v480
          %v497 = vrsqrt.pop %v481
          %v498 = vrsqrt.pop %v482
          %v499 = vrsqrt.pop %v483
          %v500 = vrsqrt.pop %v484
          %v501 = vmul.f32 %v389, %v485
          %v502 = vmul.f32 %v390, %v486
          %v503 = vmul.f32 %v391, %v487
          %v504 = vmul.f32 %v392, %v488
          %v505 = vmul.f32 %v393, %v489
          %v506 = vmul.f32 %v394, %v490
          %v507 = vmul.f32 %v395, %v491
          %v508 = vmul.f32 %v396, %v492
          %v509 = vmul.f32 %v397, %v493
          %v510 = vmul.f32 %v398, %v494
          %v511 = vmul.f32 %v399, %v495
          %v512 = vmul.f32 %v400, %v496
          %v513 = vmul.f32 %v401, %v497
          %v514 = vmul.f32 %v402, %v498
          %v515 = vmul.f32 %v403, %v499
          %v516 = vmul.f32 %v404, %v500
          %v517 = vld [vmem:[%s1] sm:$0x1]
          %v519 = vlaneseq
          %v520 = vshrl.u32 %v519, 7
          %v521 = vsub.s32 0, %v520
          %v522 = vrot.slane %v517, %v521
          %v524 = vmul.f32 %v501, %v522
          %v525 = vmul.f32 %v502, %v522
          %v526 = vmul.f32 %v503, %v522
          %v527 = vmul.f32 %v504, %v522
          %v528 = vmul.f32 %v505, %v522
          %v529 = vmul.f32 %v506, %v522
          %v530 = vmul.f32 %v507, %v522
          %v531 = vmul.f32 %v508, %v522
          %v532 = vmul.f32 %v509, %v522
          %v533 = vmul.f32 %v510, %v522
          %v534 = vmul.f32 %v511, %v522
          %v535 = vmul.f32 %v512, %v522
          %v536 = vmul.f32 %v513, %v522
          %v537 = vmul.f32 %v514, %v522
          %v538 = vmul.f32 %v515, %v522
          %v539 = vmul.f32 %v516, %v522
          %v540 = vld [vmem:[%s2] sm:$0x1]
          %v542 = vlaneseq
          %v543 = vshrl.u32 %v542, 7
          %v544 = vsub.s32 0, %v543
          %v545 = vrot.slane %v540, %v544
          %v547 = vadd.f32 %v524, %v545
          %v548 = vadd.f32 %v525, %v545
          %v549 = vadd.f32 %v526, %v545
          %v550 = vadd.f32 %v527, %v545
          %v551 = vadd.f32 %v528, %v545
          %v552 = vadd.f32 %v529, %v545
          %v553 = vadd.f32 %v530, %v545
          %v554 = vadd.f32 %v531, %v545
          %v555 = vadd.f32 %v532, %v545
          %v556 = vadd.f32 %v533, %v545
          %v557 = vadd.f32 %v534, %v545
          %v558 = vadd.f32 %v535, %v545
          %v559 = vadd.f32 %v536, %v545
          %v560 = vadd.f32 %v537, %v545
          %v561 = vadd.f32 %v538, %v545
          %v562 = vadd.f32 %v539, %v545
          %563 = vst [vmem:[#allocation3] sm:$0xff] %v547
          %564 = vst [vmem:[#allocation3 + $0x8] sm:$0xff] %v548
          %565 = vst [vmem:[#allocation3 + $0x10] sm:$0xff] %v549
          %566 = vst [vmem:[#allocation3 + $0x18] sm:$0xff] %v550
          %567 = vst [vmem:[#allocation3 + $0x20] sm:$0xff] %v551
          %568 = vst [vmem:[#allocation3 + $0x28] sm:$0xff] %v552
          %569 = vst [vmem:[#allocation3 + $0x30] sm:$0xff] %v553
          %570 = vst [vmem:[#allocation3 + $0x38] sm:$0xff] %v554
          %571 = vst [vmem:[#allocation3 + $0x40] sm:$0xff] %v555
          %572 = vst [vmem:[#allocation3 + $0x48] sm:$0xff] %v556
          %573 = vst [vmem:[#allocation3 + $0x50] sm:$0xff] %v557
          %574 = vst [vmem:[#allocation3 + $0x58] sm:$0xff] %v558
          %575 = vst [vmem:[#allocation3 + $0x60] sm:$0xff] %v559
          %576 = vst [vmem:[#allocation3 + $0x68] sm:$0xff] %v560
          %577 = vst [vmem:[#allocation3 + $0x70] sm:$0xff] %v561
          %578 = vst [vmem:[#allocation3 + $0x78] sm:$0xff] %v562
        $region56: #{tpu_custom_call.1} parent=39 // pred_fallthru
          _
        %v579 = vld [vmem:[#allocation3] sm:$0xff]
        %v580 = vld [vmem:[#allocation3 + $0x8] sm:$0xff]
        %v581 = vld [vmem:[#allocation3 + $0x10] sm:$0xff]
        %v582 = vld [vmem:[#allocation3 + $0x18] sm:$0xff]
        %v583 = vld [vmem:[#allocation3 + $0x20] sm:$0xff]
        %v584 = vld [vmem:[#allocation3 + $0x28] sm:$0xff]
        %v585 = vld [vmem:[#allocation3 + $0x30] sm:$0xff]
        %v586 = vld [vmem:[#allocation3 + $0x38] sm:$0xff]
        %v587 = vld [vmem:[#allocation3 + $0x40] sm:$0xff]
        %v588 = vld [vmem:[#allocation3 + $0x48] sm:$0xff]
        %v589 = vld [vmem:[#allocation3 + $0x50] sm:$0xff]
        %v590 = vld [vmem:[#allocation3 + $0x58] sm:$0xff]
        %v591 = vld [vmem:[#allocation3 + $0x60] sm:$0xff]
        %v592 = vld [vmem:[#allocation3 + $0x68] sm:$0xff]
        %v593 = vld [vmem:[#allocation3 + $0x70] sm:$0xff]
        %v594 = vld [vmem:[#allocation3 + $0x78] sm:$0xff]
        %v595 = vld [vmem:[#allocation7] sm:$0xff]
        %v596 = vld [vmem:[#allocation7 + $0x8] sm:$0xff]
        %v597 = vld [vmem:[#allocation7 + $0x10] sm:$0xff]
        %v598 = vld [vmem:[#allocation7 + $0x18] sm:$0xff]
        %v599 = vld [vmem:[#allocation7 + $0x20] sm:$0xff]
        %v600 = vld [vmem:[#allocation7 + $0x28] sm:$0xff]
        %v601 = vld [vmem:[#allocation7 + $0x30] sm:$0xff]
        %v602 = vld [vmem:[#allocation7 + $0x38] sm:$0xff]
        %v603 = vld [vmem:[#allocation7 + $0x40] sm:$0xff]
        %v604 = vld [vmem:[#allocation7 + $0x48] sm:$0xff]
        %v605 = vld [vmem:[#allocation7 + $0x50] sm:$0xff]
        %v606 = vld [vmem:[#allocation7 + $0x58] sm:$0xff]
        %v607 = vld [vmem:[#allocation7 + $0x60] sm:$0xff]
        %v608 = vld [vmem:[#allocation7 + $0x68] sm:$0xff]
        %v609 = vld [vmem:[#allocation7 + $0x70] sm:$0xff]
        %v610 = vld [vmem:[#allocation7 + $0x78] sm:$0xff]
        %v611 = vld [vmem:[#allocation7 + $0x80] sm:$0xff]
        %v612 = vld [vmem:[#allocation7 + $0x88] sm:$0xff]
        %v613 = vld [vmem:[#allocation7 + $0x90] sm:$0xff]
        %v614 = vld [vmem:[#allocation7 + $0x98] sm:$0xff]
        %v615 = vld [vmem:[#allocation7 + $0xa0] sm:$0xff]
        %v616 = vld [vmem:[#allocation7 + $0xa8] sm:$0xff]
        %v617 = vld [vmem:[#allocation7 + $0xb0] sm:$0xff]
        %v618 = vld [vmem:[#allocation7 + $0xb8] sm:$0xff]
        %v619 = vld [vmem:[#allocation7 + $0xc0] sm:$0xff]
        %v620 = vld [vmem:[#allocation7 + $0xc8] sm:$0xff]
        %v621 = vld [vmem:[#allocation7 + $0xd0] sm:$0xff]
        %v622 = vld [vmem:[#allocation7 + $0xd8] sm:$0xff]
        %v623 = vld [vmem:[#allocation7 + $0xe0] sm:$0xff]
        %v624 = vld [vmem:[#allocation7 + $0xe8] sm:$0xff]
        %v625 = vld [vmem:[#allocation7 + $0xf0] sm:$0xff]
        %v626 = vld [vmem:[#allocation7 + $0xf8] sm:$0xff]
        %v627 = vld [vmem:[#allocation7 + $0x100] sm:$0xff]
        %v628 = vld [vmem:[#allocation7 + $0x108] sm:$0xff]
        %v629 = vld [vmem:[#allocation7 + $0x110] sm:$0xff]
        %v630 = vld [vmem:[#allocation7 + $0x118] sm:$0xff]
        %v631 = vld [vmem:[#allocation7 + $0x120] sm:$0xff]
        %v632 = vld [vmem:[#allocation7 + $0x128] sm:$0xff]
        %v633 = vld [vmem:[#allocation7 + $0x130] sm:$0xff]
        %v634 = vld [vmem:[#allocation7 + $0x138] sm:$0xff]
        %v635 = vld [vmem:[#allocation7 + $0x140] sm:$0xff]
        %v636 = vld [vmem:[#allocation7 + $0x148] sm:$0xff]
        %v637 = vld [vmem:[#allocation7 + $0x150] sm:$0xff]
        %v638 = vld [vmem:[#allocation7 + $0x158] sm:$0xff]
        %v639 = vld [vmem:[#allocation7 + $0x160] sm:$0xff]
        %v640 = vld [vmem:[#allocation7 + $0x168] sm:$0xff]
        %v641 = vld [vmem:[#allocation7 + $0x170] sm:$0xff]
        %v642 = vld [vmem:[#allocation7 + $0x178] sm:$0xff]
        %v643 = vld [vmem:[#allocation7 + $0x180] sm:$0xff]
        %v644 = vld [vmem:[#allocation7 + $0x188] sm:$0xff]
        %v645 = vld [vmem:[#allocation7 + $0x190] sm:$0xff]
        %v646 = vld [vmem:[#allocation7 + $0x198] sm:$0xff]
        %v647 = vld [vmem:[#allocation7 + $0x1a0] sm:$0xff]
        %v648 = vld [vmem:[#allocation7 + $0x1a8] sm:$0xff]
        %v649 = vld [vmem:[#allocation7 + $0x1b0] sm:$0xff]
        %v650 = vld [vmem:[#allocation7 + $0x1b8] sm:$0xff]
        %v651 = vld [vmem:[#allocation7 + $0x1c0] sm:$0xff]
        %v652 = vld [vmem:[#allocation7 + $0x1c8] sm:$0xff]
        %v653 = vld [vmem:[#allocation7 + $0x1d0] sm:$0xff]
        %v654 = vld [vmem:[#allocation7 + $0x1d8] sm:$0xff]
        %v655 = vld [vmem:[#allocation7 + $0x1e0] sm:$0xff]
        %v656 = vld [vmem:[#allocation7 + $0x1e8] sm:$0xff]
        %v657 = vld [vmem:[#allocation7 + $0x1f0] sm:$0xff]
        %v658 = vld [vmem:[#allocation7 + $0x1f8] sm:$0xff]
        %659 = vmatprep.subr.mxu0 %v596
        %660 = vmatpush1.msra.mxu0 %v595
        %661 = vmatprep.subr.mxu0 %v600
        %662 = vmatpush1.msra.mxu0 %v599
        %663 = vmatprep.subr.mxu0 %v604
        %664 = vmatpush1.msra.mxu0 %v603
        %665 = vmatprep.subr.mxu0 %v608
        %666 = vmatpush1.msra.mxu0 %v607
        %667 = vmatprep.subr.mxu0 %v612
        %668 = vmatpush1.msra.mxu0 %v611
        %669 = vmatprep.subr.mxu0 %v616
        %670 = vmatpush1.msra.mxu0 %v615
        %671 = vmatprep.subr.mxu0 %v620
        %672 = vmatpush1.msra.mxu0 %v619
        %673 = vmatprep.subr.mxu0 %v624
        %674 = vmatpush1.msra.mxu0 %v623
        %675 = vmatprep.subr.mxu0 %v628
        %676 = vmatpush1.msra.mxu0 %v627
        %677 = vmatprep.subr.mxu0 %v632
        %678 = vmatpush1.msra.mxu0 %v631
        %679 = vmatprep.subr.mxu0 %v636
        %680 = vmatpush1.msra.mxu0 %v635
        %681 = vmatprep.subr.mxu0 %v640
        %682 = vmatpush1.msra.mxu0 %v639
        %683 = vmatprep.subr.mxu0 %v644
        %684 = vmatpush1.msra.mxu0 %v643
        %685 = vmatprep.subr.mxu0 %v648
        %686 = vmatpush1.msra.mxu0 %v647
        %687 = vmatprep.subr.mxu0 %v652
        %688 = vmatpush1.msra.mxu0 %v651
        %689 = vmatprep.subr.mxu0 %v656
        %690 = vmatpush1.msra.mxu0 %v655
        %691 = vmatprep.subr.mxu0 0.0
        %692 = vmatpush1.msra.mxu0 0.0
        %693 = vmatprep.subr.mxu0 0.0
        %694 = vmatpush1.msra.mxu0 0.0
        %695 = vmatprep.subr.mxu0 0.0
        %696 = vmatpush1.msra.mxu0 0.0
        %697 = vmatprep.subr.mxu0 0.0
        %698 = vmatpush1.msra.mxu0 0.0
        %699 = vmatprep.subr.mxu0 0.0
        %700 = vmatpush1.msra.mxu0 0.0
        %701 = vmatprep.subr.mxu0 0.0
        %702 = vmatpush1.msra.mxu0 0.0
        %703 = vmatprep.subr.mxu0 0.0
        %704 = vmatpush1.msra.mxu0 0.0
        %705 = vmatprep.subr.mxu0 0.0
        %706 = vmatpush1.msra.mxu0 0.0
        %707 = vmatprep.subr.mxu0 0.0
        %708 = vmatpush1.msra.mxu0 0.0
        %709 = vmatprep.subr.mxu0 0.0
        %710 = vmatpush1.msra.mxu0 0.0
        %711 = vmatprep.subr.mxu0 0.0
        %712 = vmatpush1.msra.mxu0 0.0
        %713 = vmatprep.subr.mxu0 0.0
        %714 = vmatpush1.msra.mxu0 0.0
        %715 = vmatprep.subr.mxu0 0.0
        %716 = vmatpush1.msra.mxu0 0.0
        %717 = vmatprep.subr.mxu0 0.0
        %718 = vmatpush1.msra.mxu0 0.0
        %719 = vmatprep.subr.mxu0 0.0
        %720 = vmatpush1.msra.mxu0 0.0
        %721 = vmatprep.subr.mxu0 0.0
        %722 = vmatpush1.msra.mxu0 0.0
        %723 = vmatprep.mubr.f32.mxu0 0.0
        %724 = vmatmul.mubr.f32.gmra.mrb[0].mxu0 %v579
        %v725 = vpop.f32.mrb[0].mxu0
        %v726 = vadd.f32 0.0, %v725
        %v727 = vpop.f32.mrb[0].mxu0
        %v728 = vadd.f32 0.0, %v727
        %729 = vmatprep.mubr.f32.mxu0 0.0
        %730 = vmatmul.mubr.f32.gmra.mrb[0].mxu0 %v580
        %v731 = vpop.f32.mrb[0].mxu0
        %v732 = vadd.f32 0.0, %v731
        %v733 = vpop.f32.mrb[0].mxu0
        %v734 = vadd.f32 0.0, %v733
        %735 = vmatprep.mubr.f32.mxu0 0.0
        %736 = vmatmul.mubr.f32.gmra.mrb[0].mxu0 %v581
        %v737 = vpop.f32.mrb[0].mxu0
        %v738 = vadd.f32 0.0, %v737
        %v739 = vpop.f32.mrb[0].mxu0
        %v740 = vadd.f32 0.0, %v739
        %741 = vmatprep.mubr.f32.mxu0 0.0
        %742 = vmatmul.mubr.f32.gmra.mrb[0].mxu0 %v582
        %v743 = vpop.f32.mrb[0].mxu0
        %v744 = vadd.f32 0.0, %v743
        %v745 = vpop.f32.mrb[0].mxu0
        %v746 = vadd.f32 0.0, %v745
        %747 = vmatprep.mubr.f32.mxu0 0.0
        %748 = vmatmul.mubr.f32.gmra.mrb[0].mxu0 %v583
        %v749 = vpop.f32.mrb[0].mxu0
        %v750 = vadd.f32 0.0, %v749
        %v751 = vpop.f32.mrb[0].mxu0
        %v752 = vadd.f32 0.0, %v751
        %753 = vmatprep.mubr.f32.mxu0 0.0
        %754 = vmatmul.mubr.f32.gmra.mrb[0].mxu0 %v584
        %v755 = vpop.f32.mrb[0].mxu0
        %v756 = vadd.f32 0.0, %v755
        %v757 = vpop.f32.mrb[0].mxu0
        %v758 = vadd.f32 0.0, %v757
        %759 = vmatprep.mubr.f32.mxu0 0.0
        %760 = vmatmul.mubr.f32.gmra.mrb[0].mxu0 %v585
        %v761 = vpop.f32.mrb[0].mxu0
        %v762 = vadd.f32 0.0, %v761
        %v763 = vpop.f32.mrb[0].mxu0
        %v764 = vadd.f32 0.0, %v763
        %765 = vmatprep.mubr.f32.mxu0 0.0
        %766 = vmatmul.mubr.f32.gmra.mrb[0].mxu0 %v586
        %v767 = vpop.f32.mrb[0].mxu0
        %v768 = vadd.f32 0.0, %v767
        %v769 = vpop.f32.mrb[0].mxu0
        %v770 = vadd.f32 0.0, %v769
        %771 = vmatprep.mubr.f32.mxu0 0.0
        %772 = vmatmul.mubr.f32.gmra.mrb[0].mxu0 %v587
        %v773 = vpop.f32.mrb[0].mxu0
        %v774 = vadd.f32 0.0, %v773
        %v775 = vpop.f32.mrb[0].mxu0
        %v776 = vadd.f32 0.0, %v775
        %777 = vmatprep.mubr.f32.mxu0 0.0
        %778 = vmatmul.mubr.f32.gmra.mrb[0].mxu0 %v588
        %v779 = vpop.f32.mrb[0].mxu0
        %v780 = vadd.f32 0.0, %v779
        %v781 = vpop.f32.mrb[0].mxu0
        %v782 = vadd.f32 0.0, %v781
        %783 = vmatprep.mubr.f32.mxu0 0.0
        %784 = vmatmul.mubr.f32.gmra.mrb[0].mxu0 %v589
        %v785 = vpop.f32.mrb[0].mxu0
        %v786 = vadd.f32 0.0, %v785
        %v787 = vpop.f32.mrb[0].mxu0
        %v788 = vadd.f32 0.0, %v787
        %789 = vmatprep.mubr.f32.mxu0 0.0
        %790 = vmatmul.mubr.f32.gmra.mrb[0].mxu0 %v590
        %v791 = vpop.f32.mrb[0].mxu0
        %v792 = vadd.f32 0.0, %v791
        %v793 = vpop.f32.mrb[0].mxu0
        %v794 = vadd.f32 0.0, %v793
        %795 = vmatprep.mubr.f32.mxu0 0.0
        %796 = vmatmul.mubr.f32.gmra.mrb[0].mxu0 %v591
        %v797 = vpop.f32.mrb[0].mxu0
        %v798 = vadd.f32 0.0, %v797
        %v799 = vpop.f32.mrb[0].mxu0
        %v800 = vadd.f32 0.0, %v799
        %801 = vmatprep.mubr.f32.mxu0 0.0
        %802 = vmatmul.mubr.f32.gmra.mrb[0].mxu0 %v592
        %v803 = vpop.f32.mrb[0].mxu0
        %v804 = vadd.f32 0.0, %v803
        %v805 = vpop.f32.mrb[0].mxu0
        %v806 = vadd.f32 0.0, %v805
        %807 = vmatprep.mubr.f32.mxu0 0.0
        %808 = vmatmul.mubr.f32.gmra.mrb[0].mxu0 %v593
        %v809 = vpop.f32.mrb[0].mxu0
        %v810 = vadd.f32 0.0, %v809
        %v811 = vpop.f32.mrb[0].mxu0
        %v812 = vadd.f32 0.0, %v811
        %813 = vmatprep.mubr.f32.mxu0 0.0
        %814 = vmatmul.mubr.f32.gmra.mrb[0].mxu0 %v594
        %v815 = vpop.f32.mrb[0].mxu0
        %v816 = vadd.f32 0.0, %v815
        %v817 = vpop.f32.mrb[0].mxu0
        %v818 = vadd.f32 0.0, %v817
        %819 = vdwg.mxu0
        %820 = vmatprep.subr.mxu0 %v598
        %821 = vmatpush1.msra.mxu0 %v597
        %822 = vmatprep.subr.mxu0 %v602
        %823 = vmatpush1.msra.mxu0 %v601
        %824 = vmatprep.subr.mxu0 %v606
        %825 = vmatpush1.msra.mxu0 %v605
        %826 = vmatprep.subr.mxu0 %v610
        %827 = vmatpush1.msra.mxu0 %v609
        %828 = vmatprep.subr.mxu0 %v614
        %829 = vmatpush1.msra.mxu0 %v613
        %830 = vmatprep.subr.mxu0 %v618
        %831 = vmatpush1.msra.mxu0 %v617
        %832 = vmatprep.subr.mxu0 %v622
        %833 = vmatpush1.msra.mxu0 %v621
        %834 = vmatprep.subr.mxu0 %v626
        %835 = vmatpush1.msra.mxu0 %v625
        %836 = vmatprep.subr.mxu0 %v630
        %837 = vmatpush1.msra.mxu0 %v629
        %838 = vmatprep.subr.mxu0 %v634
        %839 = vmatpush1.msra.mxu0 %v633
        %840 = vmatprep.subr.mxu0 %v638
        %841 = vmatpush1.msra.mxu0 %v637
        %842 = vmatprep.subr.mxu0 %v642
        %843 = vmatpush1.msra.mxu0 %v641
        %844 = vmatprep.subr.mxu0 %v646
        %845 = vmatpush1.msra.mxu0 %v645
        %846 = vmatprep.subr.mxu0 %v650
        %847 = vmatpush1.msra.mxu0 %v649
        %848 = vmatprep.subr.mxu0 %v654
        %849 = vmatpush1.msra.mxu0 %v653
        %850 = vmatprep.subr.mxu0 %v658
        %851 = vmatpush1.msra.mxu0 %v657
        %852 = vmatprep.subr.mxu0 0.0
        %853 = vmatpush1.msra.mxu0 0.0
        %854 = vmatprep.subr.mxu0 0.0
        %855 = vmatpush1.msra.mxu0 0.0
        %856 = vmatprep.subr.mxu0 0.0
        %857 = vmatpush1.msra.mxu0 0.0
        %858 = vmatprep.subr.mxu0 0.0
        %859 = vmatpush1.msra.mxu0 0.0
        %860 = vmatprep.subr.mxu0 0.0
        %861 = vmatpush1.msra.mxu0 0.0
        %862 = vmatprep.subr.mxu0 0.0
        %863 = vmatpush1.msra.mxu0 0.0
        %864 = vmatprep.subr.mxu0 0.0
        %865 = vmatpush1.msra.mxu0 0.0
        %866 = vmatprep.subr.mxu0 0.0
        %867 = vmatpush1.msra.mxu0 0.0
        %868 = vmatprep.subr.mxu0 0.0
        %869 = vmatpush1.msra.mxu0 0.0
        %870 = vmatprep.subr.mxu0 0.0
        %871 = vmatpush1.msra.mxu0 0.0
        %872 = vmatprep.subr.mxu0 0.0
        %873 = vmatpush1.msra.mxu0 0.0
        %874 = vmatprep.subr.mxu0 0.0
        %875 = vmatpush1.msra.mxu0 0.0
        %876 = vmatprep.subr.mxu0 0.0
        %877 = vmatpush1.msra.mxu0 0.0
        %878 = vmatprep.subr.mxu0 0.0
        %879 = vmatpush1.msra.mxu0 0.0
        %880 = vmatprep.subr.mxu0 0.0
        %881 = vmatpush1.msra.mxu0 0.0
        %882 = vmatprep.subr.mxu0 0.0
        %883 = vmatpush1.msra.mxu0 0.0
        %884 = vmatprep.mubr.f32.mxu0 0.0
        %885 = vmatmul.mubr.f32.gmra.mrb[0].mxu0 %v579
        %v886 = vpop.f32.mrb[0].mxu0
        %v887 = vadd.f32 0.0, %v886
        %v888 = vpop.f32.mrb[0].mxu0
        %v889 = vadd.f32 0.0, %v888
        %890 = vmatprep.mubr.f32.mxu0 0.0
        %891 = vmatmul.mubr.f32.gmra.mrb[0].mxu0 %v580
        %v892 = vpop.f32.mrb[0].mxu0
        %v893 = vadd.f32 0.0, %v892
        %v894 = vpop.f32.mrb[0].mxu0
        %v895 = vadd.f32 0.0, %v894
        %896 = vmatprep.mubr.f32.mxu0 0.0
        %897 = vmatmul.mubr.f32.gmra.mrb[0].mxu0 %v581
        %v898 = vpop.f32.mrb[0].mxu0
        %v899 = vadd.f32 0.0, %v898
        %v900 = vpop.f32.mrb[0].mxu0
        %v901 = vadd.f32 0.0, %v900
        %902 = vmatprep.mubr.f32.mxu0 0.0
        %903 = vmatmul.mubr.f32.gmra.mrb[0].mxu0 %v582
        %v904 = vpop.f32.mrb[0].mxu0
        %v905 = vadd.f32 0.0, %v904
        %v906 = vpop.f32.mrb[0].mxu0
        %v907 = vadd.f32 0.0, %v906
        %908 = vmatprep.mubr.f32.mxu0 0.0
        %909 = vmatmul.mubr.f32.gmra.mrb[0].mxu0 %v583
        %v910 = vpop.f32.mrb[0].mxu0
        %v911 = vadd.f32 0.0, %v910
        %v912 = vpop.f32.mrb[0].mxu0
        %v913 = vadd.f32 0.0, %v912
        %914 = vmatprep.mubr.f32.mxu0 0.0
        %915 = vmatmul.mubr.f32.gmra.mrb[0].mxu0 %v584
        %v916 = vpop.f32.mrb[0].mxu0
        %v917 = vadd.f32 0.0, %v916
        %v918 = vpop.f32.mrb[0].mxu0
        %v919 = vadd.f32 0.0, %v918
        %920 = vmatprep.mubr.f32.mxu0 0.0
        %921 = vmatmul.mubr.f32.gmra.mrb[0].mxu0 %v585
        %v922 = vpop.f32.mrb[0].mxu0
        %v923 = vadd.f32 0.0, %v922
        %v924 = vpop.f32.mrb[0].mxu0
        %v925 = vadd.f32 0.0, %v924
        %926 = vmatprep.mubr.f32.mxu0 0.0
        %927 = vmatmul.mubr.f32.gmra.mrb[0].mxu0 %v586
        %v928 = vpop.f32.mrb[0].mxu0
        %v929 = vadd.f32 0.0, %v928
        %v930 = vpop.f32.mrb[0].mxu0
        %v931 = vadd.f32 0.0, %v930
        %932 = vmatprep.mubr.f32.mxu0 0.0
        %933 = vmatmul.mubr.f32.gmra.mrb[0].mxu0 %v587
        %v934 = vpop.f32.mrb[0].mxu0
        %v935 = vadd.f32 0.0, %v934
        %v936 = vpop.f32.mrb[0].mxu0
        %v937 = vadd.f32 0.0, %v936
        %938 = vmatprep.mubr.f32.mxu0 0.0
        %939 = vmatmul.mubr.f32.gmra.mrb[0].mxu0 %v588
        %v940 = vpop.f32.mrb[0].mxu0
        %v941 = vadd.f32 0.0, %v940
        %v942 = vpop.f32.mrb[0].mxu0
        %v943 = vadd.f32 0.0, %v942
        %944 = vmatprep.mubr.f32.mxu0 0.0
        %945 = vmatmul.mubr.f32.gmra.mrb[0].mxu0 %v589
        %v946 = vpop.f32.mrb[0].mxu0
        %v947 = vadd.f32 0.0, %v946
        %v948 = vpop.f32.mrb[0].mxu0
        %v949 = vadd.f32 0.0, %v948
        %950 = vmatprep.mubr.f32.mxu0 0.0
        %951 = vmatmul.mubr.f32.gmra.mrb[0].mxu0 %v590
        %v952 = vpop.f32.mrb[0].mxu0
        %v953 = vadd.f32 0.0, %v952
        %v954 = vpop.f32.mrb[0].mxu0
        %v955 = vadd.f32 0.0, %v954
        %956 = vmatprep.mubr.f32.mxu0 0.0
        %957 = vmatmul.mubr.f32.gmra.mrb[0].mxu0 %v591
        %v958 = vpop.f32.mrb[0].mxu0
        %v959 = vadd.f32 0.0, %v958
        %v960 = vpop.f32.mrb[0].mxu0
        %v961 = vadd.f32 0.0, %v960
        %962 = vmatprep.mubr.f32.mxu0 0.0
        %963 = vmatmul.mubr.f32.gmra.mrb[0].mxu0 %v592
        %v964 = vpop.f32.mrb[0].mxu0
        %v965 = vadd.f32 0.0, %v964
        %v966 = vpop.f32.mrb[0].mxu0
        %v967 = vadd.f32 0.0, %v966
        %968 = vmatprep.mubr.f32.mxu0 0.0
        %969 = vmatmul.mubr.f32.gmra.mrb[0].mxu0 %v593
        %v970 = vpop.f32.mrb[0].mxu0
        %v971 = vadd.f32 0.0, %v970
        %v972 = vpop.f32.mrb[0].mxu0
        %v973 = vadd.f32 0.0, %v972
        %974 = vmatprep.mubr.f32.mxu0 0.0
        %975 = vmatmul.mubr.f32.gmra.mrb[0].mxu0 %v594
        %v976 = vpop.f32.mrb[0].mxu0
        %v977 = vadd.f32 0.0, %v976
        %v978 = vpop.f32.mrb[0].mxu0
        %v979 = vadd.f32 0.0, %v978
        %980 = vdwg.mxu0
        %v981 = vxor.u32 %v887, 2147483648
        %v982 = vxor.u32 %v889, 2147483648
        %v983 = vxor.u32 %v893, 2147483648
        %v984 = vxor.u32 %v895, 2147483648
        %v985 = vxor.u32 %v899, 2147483648
        %v986 = vxor.u32 %v901, 2147483648
        %v987 = vxor.u32 %v905, 2147483648
        %v988 = vxor.u32 %v907, 2147483648
        %v989 = vxor.u32 %v911, 2147483648
        %v990 = vxor.u32 %v913, 2147483648
        %v991 = vxor.u32 %v917, 2147483648
        %v992 = vxor.u32 %v919, 2147483648
        %v993 = vxor.u32 %v923, 2147483648
        %v994 = vxor.u32 %v925, 2147483648
        %v995 = vxor.u32 %v929, 2147483648
        %v996 = vxor.u32 %v931, 2147483648
        %v997 = vxor.u32 %v935, 2147483648
        %v998 = vxor.u32 %v937, 2147483648
        %v999 = vxor.u32 %v941, 2147483648
        %v1000 = vxor.u32 %v943, 2147483648
        %v1001 = vxor.u32 %v947, 2147483648
        %v1002 = vxor.u32 %v949, 2147483648
        %v1003 = vxor.u32 %v953, 2147483648
        %v1004 = vxor.u32 %v955, 2147483648
        %v1005 = vxor.u32 %v959, 2147483648
        %v1006 = vxor.u32 %v961, 2147483648
        %v1007 = vxor.u32 %v965, 2147483648
        %v1008 = vxor.u32 %v967, 2147483648
        %v1009 = vxor.u32 %v971, 2147483648
        %v1010 = vxor.u32 %v973, 2147483648
        %v1011 = vxor.u32 %v977, 2147483648
        %v1012 = vxor.u32 %v979, 2147483648
        %v1013 = vmul.f32 %v981, 1.442695
        %v1014 = vpow.pop %v1013
        %v1015 = vmul.f32 %v982, 1.442695
        %v1016 = vpow.pop %v1015
        %v1017 = vmul.f32 %v983, 1.442695
        %v1018 = vpow.pop %v1017
        %v1019 = vmul.f32 %v984, 1.442695
        %v1020 = vpow.pop %v1019
        %v1021 = vmul.f32 %v985, 1.442695
        %v1022 = vpow.pop %v1021
        %v1023 = vmul.f32 %v986, 1.442695
        %v1024 = vpow.pop %v1023
        %v1025 = vmul.f32 %v987, 1.442695
        %v1026 = vpow.pop %v1025
        %v1027 = vmul.f32 %v988, 1.442695
        %v1028 = vpow.pop %v1027
        %v1029 = vmul.f32 %v989, 1.442695
        %v1030 = vpow.pop %v1029
        %v1031 = vmul.f32 %v990, 1.442695
        %v1032 = vpow.pop %v1031
        %v1033 = vmul.f32 %v991, 1.442695
        %v1034 = vpow.pop %v1033
        %v1035 = vmul.f32 %v992, 1.442695
        %v1036 = vpow.pop %v1035
        %v1037 = vmul.f32 %v993, 1.442695
        %v1038 = vpow.pop %v1037
        %v1039 = vmul.f32 %v994, 1.442695
        %v1040 = vpow.pop %v1039
        %v1041 = vmul.f32 %v995, 1.442695
        %v1042 = vpow.pop %v1041
        %v1043 = vmul.f32 %v996, 1.442695
        %v1044 = vpow.pop %v1043
        %v1045 = vmul.f32 %v997, 1.442695
        %v1046 = vpow.pop %v1045
        %v1047 = vmul.f32 %v998, 1.442695
        %v1048 = vpow.pop %v1047
        %v1049 = vmul.f32 %v999, 1.442695
        %v1050 = vpow.pop %v1049
        %v1051 = vmul.f32 %v1000, 1.442695
        %v1052 = vpow.pop %v1051
        %v1053 = vmul.f32 %v1001, 1.442695
        %v1054 = vpow.pop %v1053
        %v1055 = vmul.f32 %v1002, 1.442695
        %v1056 = vpow.pop %v1055
        %v1057 = vmul.f32 %v1003, 1.442695
        %v1058 = vpow.pop %v1057
        %v1059 = vmul.f32 %v1004, 1.442695
        %v1060 = vpow.pop %v1059
        %v1061 = vmul.f32 %v1005, 1.442695
        %v1062 = vpow.pop %v1061
        %v1063 = vmul.f32 %v1006, 1.442695
        %v1064 = vpow.pop %v1063
        %v1065 = vmul.f32 %v1007, 1.442695
        %v1066 = vpow.pop %v1065
        %v1067 = vmul.f32 %v1008, 1.442695
        %v1068 = vpow.pop %v1067
        %v1069 = vmul.f32 %v1009, 1.442695
        %v1070 = vpow.pop %v1069
        %v1071 = vmul.f32 %v1010, 1.442695
        %v1072 = vpow.pop %v1071
        %v1073 = vmul.f32 %v1011, 1.442695
        %v1074 = vpow.pop %v1073
        %v1075 = vmul.f32 %v1012, 1.442695
        %v1076 = vpow.pop %v1075
        %v1077 = vadd.f32 %v1014, 1.0
        %v1078 = vadd.f32 %v1016, 1.0
        %v1079 = vadd.f32 %v1018, 1.0
        %v1080 = vadd.f32 %v1020, 1.0
        %v1081 = vadd.f32 %v1022, 1.0
        %v1082 = vadd.f32 %v1024, 1.0
        %v1083 = vadd.f32 %v1026, 1.0
        %v1084 = vadd.f32 %v1028, 1.0
        %v1085 = vadd.f32 %v1030, 1.0
        %v1086 = vadd.f32 %v1032, 1.0
        %v1087 = vadd.f32 %v1034, 1.0
        %v1088 = vadd.f32 %v1036, 1.0
        %v1089 = vadd.f32 %v1038, 1.0
        %v1090 = vadd.f32 %v1040, 1.0
        %v1091 = vadd.f32 %v1042, 1.0
        %v1092 = vadd.f32 %v1044, 1.0
        %v1093 = vadd.f32 %v1046, 1.0
        %v1094 = vadd.f32 %v1048, 1.0
        %v1095 = vadd.f32 %v1050, 1.0
        %v1096 = vadd.f32 %v1052, 1.0
        %v1097 = vadd.f32 %v1054, 1.0
        %v1098 = vadd.f32 %v1056, 1.0
        %v1099 = vadd.f32 %v1058, 1.0
        %v1100 = vadd.f32 %v1060, 1.0
        %v1101 = vadd.f32 %v1062, 1.0
        %v1102 = vadd.f32 %v1064, 1.0
        %v1103 = vadd.f32 %v1066, 1.0
        %v1104 = vadd.f32 %v1068, 1.0
        %v1105 = vadd.f32 %v1070, 1.0
        %v1106 = vadd.f32 %v1072, 1.0
        %v1107 = vadd.f32 %v1074, 1.0
        %v1108 = vadd.f32 %v1076, 1.0
        %v1109 = vrcp.pop %v1077
        %v1110 = vmul.f32 1.0, %v1109
        %v1111 = vrcp.pop %v1078
        %v1112 = vmul.f32 1.0, %v1111
        %v1113 = vrcp.pop %v1079
        %v1114 = vmul.f32 1.0, %v1113
        %v1115 = vrcp.pop %v1080
        %v1116 = vmul.f32 1.0, %v1115
        %v1117 = vrcp.pop %v1081
        %v1118 = vmul.f32 1.0, %v1117
        %v1119 = vrcp.pop %v1082
        %v1120 = vmul.f32 1.0, %v1119
        %v1121 = vrcp.pop %v1083
        %v1122 = vmul.f32 1.0, %v1121
        %v1123 = vrcp.pop %v1084
        %v1124 = vmul.f32 1.0, %v1123
        %v1125 = vrcp.pop %v1085
        %v1126 = vmul.f32 1.0, %v1125
        %v1127 = vrcp.pop %v1086
        %v1128 = vmul.f32 1.0, %v1127
        %v1129 = vrcp.pop %v1087
        %v1130 = vmul.f32 1.0, %v1129
        %v1131 = vrcp.pop %v1088
        %v1132 = vmul.f32 1.0, %v1131
        %v1133 = vrcp.pop %v1089
        %v1134 = vmul.f32 1.0, %v1133
        %v1135 = vrcp.pop %v1090
        %v1136 = vmul.f32 1.0, %v1135
        %v1137 = vrcp.pop %v1091
        %v1138 = vmul.f32 1.0, %v1137
        %v1139 = vrcp.pop %v1092
        %v1140 = vmul.f32 1.0, %v1139
        %v1141 = vrcp.pop %v1093
        %v1142 = vmul.f32 1.0, %v1141
        %v1143 = vrcp.pop %v1094
        %v1144 = vmul.f32 1.0, %v1143
        %v1145 = vrcp.pop %v1095
        %v1146 = vmul.f32 1.0, %v1145
        %v1147 = vrcp.pop %v1096
        %v1148 = vmul.f32 1.0, %v1147
        %v1149 = vrcp.pop %v1097
        %v1150 = vmul.f32 1.0, %v1149
        %v1151 = vrcp.pop %v1098
        %v1152 = vmul.f32 1.0, %v1151
        %v1153 = vrcp.pop %v1099
        %v1154 = vmul.f32 1.0, %v1153
        %v1155 = vrcp.pop %v1100
        %v1156 = vmul.f32 1.0, %v1155
        %v1157 = vrcp.pop %v1101
        %v1158 = vmul.f32 1.0, %v1157
        %v1159 = vrcp.pop %v1102
        %v1160 = vmul.f32 1.0, %v1159
        %v1161 = vrcp.pop %v1103
        %v1162 = vmul.f32 1.0, %v1161
        %v1163 = vrcp.pop %v1104
        %v1164 = vmul.f32 1.0, %v1163
        %v1165 = vrcp.pop %v1105
        %v1166 = vmul.f32 1.0, %v1165
        %v1167 = vrcp.pop %v1106
        %v1168 = vmul.f32 1.0, %v1167
        %v1169 = vrcp.pop %v1107
        %v1170 = vmul.f32 1.0, %v1169
        %v1171 = vrcp.pop %v1108
        %v1172 = vmul.f32 1.0, %v1171
        %v1173 = vmul.f32 %v887, %v1110
        %v1174 = vmul.f32 %v889, %v1112
        %v1175 = vmul.f32 %v893, %v1114
        %v1176 = vmul.f32 %v895, %v1116
        %v1177 = vmul.f32 %v899, %v1118
        %v1178 = vmul.f32 %v901, %v1120
        %v1179 = vmul.f32 %v905, %v1122
        %v1180 = vmul.f32 %v907, %v1124
        %v1181 = vmul.f32 %v911, %v1126
        %v1182 = vmul.f32 %v913, %v1128
        %v1183 = vmul.f32 %v917, %v1130
        %v1184 = vmul.f32 %v919, %v1132
        %v1185 = vmul.f32 %v923, %v1134
        %v1186 = vmul.f32 %v925, %v1136
        %v1187 = vmul.f32 %v929, %v1138
        %v1188 = vmul.f32 %v931, %v1140
        %v1189 = vmul.f32 %v935, %v1142
        %v1190 = vmul.f32 %v937, %v1144
        %v1191 = vmul.f32 %v941, %v1146
        %v1192 = vmul.f32 %v943, %v1148
        %v1193 = vmul.f32 %v947, %v1150
        %v1194 = vmul.f32 %v949, %v1152
        %v1195 = vmul.f32 %v953, %v1154
        %v1196 = vmul.f32 %v955, %v1156
        %v1197 = vmul.f32 %v959, %v1158
        %v1198 = vmul.f32 %v961, %v1160
        %v1199 = vmul.f32 %v965, %v1162
        %v1200 = vmul.f32 %v967, %v1164
        %v1201 = vmul.f32 %v971, %v1166
        %v1202 = vmul.f32 %v973, %v1168
        %v1203 = vmul.f32 %v977, %v1170
        %v1204 = vmul.f32 %v979, %v1172
        %v1205 = vmul.f32 %v726, %v1173
        %v1206 = vmul.f32 %v728, %v1174
        %v1207 = vmul.f32 %v732, %v1175
        %v1208 = vmul.f32 %v734, %v1176
        %v1209 = vmul.f32 %v738, %v1177
        %v1210 = vmul.f32 %v740, %v1178
        %v1211 = vmul.f32 %v744, %v1179
        %v1212 = vmul.f32 %v746, %v1180
        %v1213 = vmul.f32 %v750, %v1181
        %v1214 = vmul.f32 %v752, %v1182
        %v1215 = vmul.f32 %v756, %v1183
        %v1216 = vmul.f32 %v758, %v1184
        %v1217 = vmul.f32 %v762, %v1185
        %v1218 = vmul.f32 %v764, %v1186
        %v1219 = vmul.f32 %v768, %v1187
        %v1220 = vmul.f32 %v770, %v1188
        %v1221 = vmul.f32 %v774, %v1189
        %v1222 = vmul.f32 %v776, %v1190
        %v1223 = vmul.f32 %v780, %v1191
        %v1224 = vmul.f32 %v782, %v1192
        %v1225 = vmul.f32 %v786, %v1193
        %v1226 = vmul.f32 %v788, %v1194
        %v1227 = vmul.f32 %v792, %v1195
        %v1228 = vmul.f32 %v794, %v1196
        %v1229 = vmul.f32 %v798, %v1197
        %v1230 = vmul.f32 %v800, %v1198
        %v1231 = vmul.f32 %v804, %v1199
        %v1232 = vmul.f32 %v806, %v1200
        %v1233 = vmul.f32 %v810, %v1201
        %v1234 = vmul.f32 %v812, %v1202
        %v1235 = vmul.f32 %v816, %v1203
        %v1236 = vmul.f32 %v818, %v1204
        %v1237 = vld [vmem:[#allocation2] sm:$0xff]
        %v1238 = vld [vmem:[#allocation2 + $0x8] sm:$0xff]
        %v1239 = vld [vmem:[#allocation2 + $0x10] sm:$0xff]
        %v1240 = vld [vmem:[#allocation2 + $0x18] sm:$0xff]
        %v1241 = vld [vmem:[#allocation2 + $0x20] sm:$0xff]
        %v1242 = vld [vmem:[#allocation2 + $0x28] sm:$0xff]
        %v1243 = vld [vmem:[#allocation2 + $0x30] sm:$0xff]
        %v1244 = vld [vmem:[#allocation2 + $0x38] sm:$0xff]
        %v1245 = vld [vmem:[#allocation2 + $0x40] sm:$0xff]
        %v1246 = vld [vmem:[#allocation2 + $0x48] sm:$0xff]
        %v1247 = vld [vmem:[#allocation2 + $0x50] sm:$0xff]
        %v1248 = vld [vmem:[#allocation2 + $0x58] sm:$0xff]
        %v1249 = vld [vmem:[#allocation2 + $0x60] sm:$0xff]
        %v1250 = vld [vmem:[#allocation2 + $0x68] sm:$0xff]
        %v1251 = vld [vmem:[#allocation2 + $0x70] sm:$0xff]
        %v1252 = vld [vmem:[#allocation2 + $0x78] sm:$0xff]
        %v1253 = vld [vmem:[#allocation9] sm:$0xff]
        %v1254 = vld [vmem:[#allocation9 + $0x8] sm:$0xff]
        %v1255 = vld [vmem:[#allocation9 + $0x10] sm:$0xff]
        %v1256 = vld [vmem:[#allocation9 + $0x18] sm:$0xff]
        %v1257 = vld [vmem:[#allocation9 + $0x20] sm:$0xff]
        %v1258 = vld [vmem:[#allocation9 + $0x28] sm:$0xff]
        %v1259 = vld [vmem:[#allocation9 + $0x30] sm:$0xff]
        %v1260 = vld [vmem:[#allocation9 + $0x38] sm:$0xff]
        %v1261 = vld [vmem:[#allocation9 + $0x40] sm:$0xff]
        %v1262 = vld [vmem:[#allocation9 + $0x48] sm:$0xff]
        %v1263 = vld [vmem:[#allocation9 + $0x50] sm:$0xff]
        %v1264 = vld [vmem:[#allocation9 + $0x58] sm:$0xff]
        %v1265 = vld [vmem:[#allocation9 + $0x60] sm:$0xff]
        %v1266 = vld [vmem:[#allocation9 + $0x68] sm:$0xff]
        %v1267 = vld [vmem:[#allocation9 + $0x70] sm:$0xff]
        %v1268 = vld [vmem:[#allocation9 + $0x78] sm:$0xff]
        %v1269 = vld [vmem:[#allocation9 + $0x80] sm:$0xff]
        %v1270 = vld [vmem:[#allocation9 + $0x88] sm:$0xff]
        %v1271 = vld [vmem:[#allocation9 + $0x90] sm:$0xff]
        %v1272 = vld [vmem:[#allocation9 + $0x98] sm:$0xff]
        %v1273 = vld [vmem:[#allocation9 + $0xa0] sm:$0xff]
        %v1274 = vld [vmem:[#allocation9 + $0xa8] sm:$0xff]
        %v1275 = vld [vmem:[#allocation9 + $0xb0] sm:$0xff]
        %v1276 = vld [vmem:[#allocation9 + $0xb8] sm:$0xff]
        %v1277 = vld [vmem:[#allocation9 + $0xc0] sm:$0xff]
        %v1278 = vld [vmem:[#allocation9 + $0xc8] sm:$0xff]
        %v1279 = vld [vmem:[#allocation9 + $0xd0] sm:$0xff]
        %v1280 = vld [vmem:[#allocation9 + $0xd8] sm:$0xff]
        %v1281 = vld [vmem:[#allocation9 + $0xe0] sm:$0xff]
        %v1282 = vld [vmem:[#allocation9 + $0xe8] sm:$0xff]
        %v1283 = vld [vmem:[#allocation9 + $0xf0] sm:$0xff]
        %v1284 = vld [vmem:[#allocation9 + $0xf8] sm:$0xff]
        %1285 = vmatprep.subr.mxu0 0.0
        %1286 = vmatpush1.msra.mxu0 %v1253
        %1287 = vmatprep.subr.mxu0 0.0
        %1288 = vmatpush1.msra.mxu0 %v1254
        %1289 = vmatprep.subr.mxu0 0.0
        %1290 = vmatpush1.msra.mxu0 %v1255
        %1291 = vmatprep.subr.mxu0 0.0
        %1292 = vmatpush1.msra.mxu0 %v1256
        %1293 = vmatprep.subr.mxu0 0.0
        %1294 = vmatpush1.msra.mxu0 %v1257
        %1295 = vmatprep.subr.mxu0 0.0
        %1296 = vmatpush1.msra.mxu0 %v1258
        %1297 = vmatprep.subr.mxu0 0.0
        %1298 = vmatpush1.msra.mxu0 %v1259
        %1299 = vmatprep.subr.mxu0 0.0
        %1300 = vmatpush1.msra.mxu0 %v1260
        %1301 = vmatprep.subr.mxu0 0.0
        %1302 = vmatpush1.msra.mxu0 %v1261
        %1303 = vmatprep.subr.mxu0 0.0
        %1304 = vmatpush1.msra.mxu0 %v1262
        %1305 = vmatprep.subr.mxu0 0.0
        %1306 = vmatpush1.msra.mxu0 %v1263
        %1307 = vmatprep.subr.mxu0 0.0
        %1308 = vmatpush1.msra.mxu0 %v1264
        %1309 = vmatprep.subr.mxu0 0.0
        %1310 = vmatpush1.msra.mxu0 %v1265
        %1311 = vmatprep.subr.mxu0 0.0
        %1312 = vmatpush1.msra.mxu0 %v1266
        %1313 = vmatprep.subr.mxu0 0.0
        %1314 = vmatpush1.msra.mxu0 %v1267
        %1315 = vmatprep.subr.mxu0 0.0
        %1316 = vmatpush1.msra.mxu0 %v1268
        %1317 = vmatprep.subr.mxu0 0.0
        %1318 = vmatpush1.msra.mxu0 %v1269
        %1319 = vmatprep.subr.mxu0 0.0
        %1320 = vmatpush1.msra.mxu0 %v1270
        %1321 = vmatprep.subr.mxu0 0.0
        %1322 = vmatpush1.msra.mxu0 %v1271
        %1323 = vmatprep.subr.mxu0 0.0
        %1324 = vmatpush1.msra.mxu0 %v1272
        %1325 = vmatprep.subr.mxu0 0.0
        %1326 = vmatpush1.msra.mxu0 %v1273
        %1327 = vmatprep.subr.mxu0 0.0
        %1328 = vmatpush1.msra.mxu0 %v1274
        %1329 = vmatprep.subr.mxu0 0.0
        %1330 = vmatpush1.msra.mxu0 %v1275
        %1331 = vmatprep.subr.mxu0 0.0
        %1332 = vmatpush1.msra.mxu0 %v1276
        %1333 = vmatprep.subr.mxu0 0.0
        %1334 = vmatpush1.msra.mxu0 %v1277
        %1335 = vmatprep.subr.mxu0 0.0
        %1336 = vmatpush1.msra.mxu0 %v1278
        %1337 = vmatprep.subr.mxu0 0.0
        %1338 = vmatpush1.msra.mxu0 %v1279
        %1339 = vmatprep.subr.mxu0 0.0
        %1340 = vmatpush1.msra.mxu0 %v1280
        %1341 = vmatprep.subr.mxu0 0.0
        %1342 = vmatpush1.msra.mxu0 %v1281
        %1343 = vmatprep.subr.mxu0 0.0
        %1344 = vmatpush1.msra.mxu0 %v1282
        %1345 = vmatprep.subr.mxu0 0.0
        %1346 = vmatpush1.msra.mxu0 %v1283
        %1347 = vmatprep.subr.mxu0 0.0
        %1348 = vmatpush1.msra.mxu0 %v1284
        %1349 = vmatprep.mubr.f32.mxu0 %v1206
        %1350 = vmatmul.mubr.f32.gmra.mrb[0].mxu0 %v1205
        %v1351 = vpop.f32.mrb[0].mxu0
        %v1352 = vadd.f32 0.0, %v1351
        %v1353 = vpop.f32.mrb[0].mxu0
        %1354 = vmatprep.mubr.f32.mxu0 %v1208
        %1355 = vmatmul.mubr.f32.gmra.mrb[0].mxu0 %v1207
        %v1356 = vpop.f32.mrb[0].mxu0
        %v1357 = vadd.f32 0.0, %v1356
        %v1358 = vpop.f32.mrb[0].mxu0
        %1359 = vmatprep.mubr.f32.mxu0 %v1210
        %1360 = vmatmul.mubr.f32.gmra.mrb[0].mxu0 %v1209
        %v1361 = vpop.f32.mrb[0].mxu0
        %v1362 = vadd.f32 0.0, %v1361
        %v1363 = vpop.f32.mrb[0].mxu0
        %1364 = vmatprep.mubr.f32.mxu0 %v1212
        %1365 = vmatmul.mubr.f32.gmra.mrb[0].mxu0 %v1211
        %v1366 = vpop.f32.mrb[0].mxu0
        %v1367 = vadd.f32 0.0, %v1366
        %v1368 = vpop.f32.mrb[0].mxu0
        %1369 = vmatprep.mubr.f32.mxu0 %v1214
        %1370 = vmatmul.mubr.f32.gmra.mrb[0].mxu0 %v1213
        %v1371 = vpop.f32.mrb[0].mxu0
        %v1372 = vadd.f32 0.0, %v1371
        %v1373 = vpop.f32.mrb[0].mxu0
        %1374 = vmatprep.mubr.f32.mxu0 %v1216
        %1375 = vmatmul.mubr.f32.gmra.mrb[0].mxu0 %v1215
        %v1376 = vpop.f32.mrb[0].mxu0
        %v1377 = vadd.f32 0.0, %v1376
        %v1378 = vpop.f32.mrb[0].mxu0
        %1379 = vmatprep.mubr.f32.mxu0 %v1218
        %1380 = vmatmul.mubr.f32.gmra.mrb[0].mxu0 %v1217
        %v1381 = vpop.f32.mrb[0].mxu0
        %v1382 = vadd.f32 0.0, %v1381
        %v1383 = vpop.f32.mrb[0].mxu0
        %1384 = vmatprep.mubr.f32.mxu0 %v1220
        %1385 = vmatmul.mubr.f32.gmra.mrb[0].mxu0 %v1219
        %v1386 = vpop.f32.mrb[0].mxu0
        %v1387 = vadd.f32 0.0, %v1386
        %v1388 = vpop.f32.mrb[0].mxu0
        %1389 = vmatprep.mubr.f32.mxu0 %v1222
        %1390 = vmatmul.mubr.f32.gmra.mrb[0].mxu0 %v1221
        %v1391 = vpop.f32.mrb[0].mxu0
        %v1392 = vadd.f32 0.0, %v1391
        %v1393 = vpop.f32.mrb[0].mxu0
        %1394 = vmatprep.mubr.f32.mxu0 %v1224
        %1395 = vmatmul.mubr.f32.gmra.mrb[0].mxu0 %v1223
        %v1396 = vpop.f32.mrb[0].mxu0
        %v1397 = vadd.f32 0.0, %v1396
        %v1398 = vpop.f32.mrb[0].mxu0
        %1399 = vmatprep.mubr.f32.mxu0 %v1226
        %1400 = vmatmul.mubr.f32.gmra.mrb[0].mxu0 %v1225
        %v1401 = vpop.f32.mrb[0].mxu0
        %v1402 = vadd.f32 0.0, %v1401
        %v1403 = vpop.f32.mrb[0].mxu0
        %1404 = vmatprep.mubr.f32.mxu0 %v1228
        %1405 = vmatmul.mubr.f32.gmra.mrb[0].mxu0 %v1227
        %v1406 = vpop.f32.mrb[0].mxu0
        %v1407 = vadd.f32 0.0, %v1406
        %v1408 = vpop.f32.mrb[0].mxu0
        %1409 = vmatprep.mubr.f32.mxu0 %v1230
        %1410 = vmatmul.mubr.f32.gmra.mrb[0].mxu0 %v1229
        %v1411 = vpop.f32.mrb[0].mxu0
        %v1412 = vadd.f32 0.0, %v1411
        %v1413 = vpop.f32.mrb[0].mxu0
        %1414 = vmatprep.mubr.f32.mxu0 %v1232
        %1415 = vmatmul.mubr.f32.gmra.mrb[0].mxu0 %v1231
        %v1416 = vpop.f32.mrb[0].mxu0
        %v1417 = vadd.f32 0.0, %v1416
        %v1418 = vpop.f32.mrb[0].mxu0
        %1419 = vmatprep.mubr.f32.mxu0 %v1234
        %1420 = vmatmul.mubr.f32.gmra.mrb[0].mxu0 %v1233
        %v1421 = vpop.f32.mrb[0].mxu0
        %v1422 = vadd.f32 0.0, %v1421
        %v1423 = vpop.f32.mrb[0].mxu0
        %1424 = vmatprep.mubr.f32.mxu0 %v1236
        %1425 = vmatmul.mubr.f32.gmra.mrb[0].mxu0 %v1235
        %v1426 = vpop.f32.mrb[0].mxu0
        %v1427 = vadd.f32 0.0, %v1426
        %v1428 = vpop.f32.mrb[0].mxu0
        %1429 = vdwg.mxu0
        %v1430 = vadd.f32 %v1237, %v1352
        %v1431 = vadd.f32 %v1238, %v1357
        %v1432 = vadd.f32 %v1239, %v1362
        %v1433 = vadd.f32 %v1240, %v1367
        %v1434 = vadd.f32 %v1241, %v1372
        %v1435 = vadd.f32 %v1242, %v1377
        %v1436 = vadd.f32 %v1243, %v1382
        %v1437 = vadd.f32 %v1244, %v1387
        %v1438 = vadd.f32 %v1245, %v1392
        %v1439 = vadd.f32 %v1246, %v1397
        %v1440 = vadd.f32 %v1247, %v1402
        %v1441 = vadd.f32 %v1248, %v1407
        %v1442 = vadd.f32 %v1249, %v1412
        %v1443 = vadd.f32 %v1250, %v1417
        %v1444 = vadd.f32 %v1251, %v1422
        %v1445 = vadd.f32 %v1252, %v1427
        %1446 = vst [vmem:[#allocation2] sm:$0xff] %v1430
        %1447 = vst [vmem:[#allocation2 + $0x8] sm:$0xff] %v1431
        %1448 = vst [vmem:[#allocation2 + $0x10] sm:$0xff] %v1432
        %1449 = vst [vmem:[#allocation2 + $0x18] sm:$0xff] %v1433
        %1450 = vst [vmem:[#allocation2 + $0x20] sm:$0xff] %v1434
        %1451 = vst [vmem:[#allocation2 + $0x28] sm:$0xff] %v1435
        %1452 = vst [vmem:[#allocation2 + $0x30] sm:$0xff] %v1436
        %1453 = vst [vmem:[#allocation2 + $0x38] sm:$0xff] %v1437
        %1454 = vst [vmem:[#allocation2 + $0x40] sm:$0xff] %v1438
        %1455 = vst [vmem:[#allocation2 + $0x48] sm:$0xff] %v1439
        %1456 = vst [vmem:[#allocation2 + $0x50] sm:$0xff] %v1440
        %1457 = vst [vmem:[#allocation2 + $0x58] sm:$0xff] %v1441
        %1458 = vst [vmem:[#allocation2 + $0x60] sm:$0xff] %v1442
        %1459 = vst [vmem:[#allocation2 + $0x68] sm:$0xff] %v1443
        %1460 = vst [vmem:[#allocation2 + $0x70] sm:$0xff] %v1444
        %1461 = vst [vmem:[#allocation2 + $0x78] sm:$0xff] %v1445
        // Predicated region
        $region57: #{tpu_custom_call.1} parent=39 // pred_check
          %p1462 = pneg %p304
        $region58: #{tpu_custom_call.1} parent=39 // pred_check_branch
          %1464 = sbr.rel (%p1462) target = $region60
        $region59: #{tpu_custom_call.1} parent=39 // pred_region
          %v1465 = vld [vmem:[#allocation2] sm:$0xff]
          %v1466 = vld [vmem:[#allocation2 + $0x8] sm:$0xff]
          %v1467 = vld [vmem:[#allocation2 + $0x10] sm:$0xff]
          %v1468 = vld [vmem:[#allocation2 + $0x18] sm:$0xff]
          %v1469 = vld [vmem:[#allocation2 + $0x20] sm:$0xff]
          %v1470 = vld [vmem:[#allocation2 + $0x28] sm:$0xff]
          %v1471 = vld [vmem:[#allocation2 + $0x30] sm:$0xff]
          %v1472 = vld [vmem:[#allocation2 + $0x38] sm:$0xff]
          %v1473 = vld [vmem:[#allocation2 + $0x40] sm:$0xff]
          %v1474 = vld [vmem:[#allocation2 + $0x48] sm:$0xff]
          %v1475 = vld [vmem:[#allocation2 + $0x50] sm:$0xff]
          %v1476 = vld [vmem:[#allocation2 + $0x58] sm:$0xff]
          %v1477 = vld [vmem:[#allocation2 + $0x60] sm:$0xff]
          %v1478 = vld [vmem:[#allocation2 + $0x68] sm:$0xff]
          %v1479 = vld [vmem:[#allocation2 + $0x70] sm:$0xff]
          %v1480 = vld [vmem:[#allocation2 + $0x78] sm:$0xff]
          %1481 = vst [vmem:[%s299] sm:$0xff] %v1465
          %1482 = vst [vmem:[%s299 + $0x8] sm:$0xff] %v1466
          %1483 = vst [vmem:[%s299 + $0x10] sm:$0xff] %v1467
          %1484 = vst [vmem:[%s299 + $0x18] sm:$0xff] %v1468
          %1485 = vst [vmem:[%s299 + $0x20] sm:$0xff] %v1469
          %1486 = vst [vmem:[%s299 + $0x28] sm:$0xff] %v1470
          %1487 = vst [vmem:[%s299 + $0x30] sm:$0xff] %v1471
          %1488 = vst [vmem:[%s299 + $0x38] sm:$0xff] %v1472
          %1489 = vst [vmem:[%s299 + $0x40] sm:$0xff] %v1473
          %1490 = vst [vmem:[%s299 + $0x48] sm:$0xff] %v1474
          %1491 = vst [vmem:[%s299 + $0x50] sm:$0xff] %v1475
          %1492 = vst [vmem:[%s299 + $0x58] sm:$0xff] %v1476
          %1493 = vst [vmem:[%s299 + $0x60] sm:$0xff] %v1477
          %1494 = vst [vmem:[%s299 + $0x68] sm:$0xff] %v1478
          %1495 = vst [vmem:[%s299 + $0x70] sm:$0xff] %v1479
          %1496 = vst [vmem:[%s299 + $0x78] sm:$0xff] %v1480
        $region60: #{tpu_custom_call.1} parent=39 // pred_fallthru
          _
        %s1497 = sand.u32 %s163, 1
        %s1498 = scalar_lea.sflag [#allocation6], %s1497
        %s1499 = sand.u32 %s163, 1
        %s1500 = smul.addr %s1499, 128
        %s1501 = scalar_lea.vmem [#allocation10], %s1500
        // Predicated region
        $region61: #{tpu_custom_call.1} parent=39 // pred_check
          %p1502 = pneg %p173
        $region62: #{tpu_custom_call.1} parent=39 // pred_check_branch
          %1504 = sbr.rel (%p1502) target = $region64
        $region63: #{tpu_custom_call.1} parent=39 // pred_region
          %s1505 = smul.u32 16, %s27
          %s1507 = ssub.s32 2048, 2048
          %1508 = vsyncadd %s1498, %s1507
          %s1509 = smul.addr %s1505, 128
          %s1510 = scalar_lea.hbm %s5, %s1509
          %s1511 = sshll.u32 %s1501, 4
          %s1512 = int_to_ptr.vmem [resolvable:$true] %s1511
          %1517 = dma.vmem_to_hbm [thread:$0]  %s1512, 2048, %s1510, %s1498, 128, 128, 8
        $region64: #{tpu_custom_call.1} parent=39 // pred_fallthru
          _
      $region40: #{tpu_custom_call.1} parent=5 // pred_fallthru
        _
      %p1518 = scmp.le.s32.totalorder 2, %s18
      // Predicated region
      $region65: #{tpu_custom_call.1} parent=5 // pred_check
        %p1519 = pneg %p1518
      $region66: #{tpu_custom_call.1} parent=5 // pred_check_branch
        %1521 = sbr.rel (%p1519) target = $region68
      $region67: #{tpu_custom_call.1} parent=5 // pred_region
        %s1522 = ssub.s32 %s18, 2
        // Predicated region
        $region69: #{tpu_custom_call.1} parent=67 // pred_check
          %p1523 = pneg %p179
        $region70: #{tpu_custom_call.1} parent=67 // pred_check_branch
          %1525 = sbr.rel (%p1523) target = $region72
        $region71: #{tpu_custom_call.1} parent=67 // pred_region
          %s1526 = sand.u32 %s164, 1
          %s1527 = scalar_lea.sflag [#allocation6], %s1526
          %s1528 = sand.u32 %s164, 1
          %s1529 = smul.addr %s1528, 128
          %s1530 = scalar_lea.vmem [#allocation10], %s1529
          %1531 = dma.done %s1527, 2048
        $region72: #{tpu_custom_call.1} parent=67 // pred_fallthru
          _
      $region68: #{tpu_custom_call.1} parent=5 // pred_fallthru
        _
    $region6: #{tpu_custom_call.1} parent=1 // loop_footer
      %s22 = sadd.s32 1, %s18
    $region7: #{tpu_custom_call.1} parent=1 // loop_footer_branch
      %17 = sbr.rel target = $region3
    $region8: #{tpu_custom_call.1} parent=1 // loop_exit
      _
    %1532 = vsyncpa [#allocation5], 1
    %s1533 = scalar_lea.sflag [#allocation5], 1
    %1534 = vsyncpa %s1533, 1
    %1535 = vsyncpa [#allocation8], 1
    %1536 = vsyncpa [#allocation6], 1
    %s1537 = scalar_lea.sflag [#allocation6], 1
    %1538 = vsyncpa %s1537, 1

</llo_original>
